<compile_context>
chip_gen: v6e
topology: v6e:2x2x1
jax: 0.10.0
libtpu: 0.0.40
codegen_flags: <defaults>
</compile_context>

<pallas_src>
import math
from functools import partial

import jax
import jax.numpy as jnp
from jax.experimental import pallas as pl
from jax.experimental.pallas import tpu as pltpu

HIDDEN = 256
OMEGA_0 = 30.0
PAD_ROWS = 8  # one sublane tile; rows 1..7 are dead compute, only row 0 is real
N_STACKED = 5  # hidden layers 1..4 + final (padded) linear


def siren_mp_kernel(x_ref, w0_ref, b0_ref, wstack_ref, bstack_ref, o_ref):
    """Single invocation: all weights resident in VMEM, layers unrolled.

    x_ref:      (PAD_ROWS, in_features) bf16
    w0_ref:     (in_features, 256)      bf16   (omega folded in)
    b0_ref:     (1, 256)                f32    (omega folded in)
    wstack_ref: (5, 256, 256)           bf16   (layers 1..4 omega-folded, layer 5 padded)
    bstack_ref: (5, 1, 256)             f32
    o_ref:      (PAD_ROWS, 256)         f32    (lane-dense; wrapper slices)
    """
    # First sine layer: bf16 x bf16 on the MXU, f32 accumulation.
    z = jnp.dot(x_ref[...], w0_ref[...],
                preferred_element_type=jnp.float32) + b0_ref[...]
    h = jnp.sin(z).astype(jnp.bfloat16)

    # Hidden sine layers 1..4 (statically unrolled; omega folded into weights).
    for i in range(N_STACKED - 1):
        z = jnp.dot(h, wstack_ref[i],
                    preferred_element_type=jnp.float32) + bstack_ref[i]
        h = jnp.sin(z).astype(jnp.bfloat16)

    # Outermost plain linear (zero-padded to 256 output lanes, no sine).
    o_ref[...] = jnp.dot(h, wstack_ref[N_STACKED - 1],
                         preferred_element_type=jnp.float32) + bstack_ref[N_STACKED - 1]


def init_siren_params(key, in_features, out_features):
    """Deterministic Siren-style init (same uniform ranges as the torch impl)."""
    dims = [in_features] + [HIDDEN] * 5 + [out_features]
    ws, bs = [], []
    for layer in range(6):
        fan_in, fan_out = dims[layer], dims[layer + 1]
        key, kw, kb = jax.random.split(key, 3)
        if layer == 0:
            w_bound = 1.0 / fan_in                        # first sine layer
        else:
            w_bound = math.sqrt(6.0 / fan_in) / OMEGA_0   # hidden / final layers
        w = jax.random.uniform(kw, (fan_in, fan_out), jnp.float32,
                               minval=-w_bound, maxval=w_bound)
        b_bound = 1.0 / math.sqrt(fan_in)                 # nn.Linear default bias
        b = jax.random.uniform(kb, (1, fan_out), jnp.float32,
                               minval=-b_bound, maxval=b_bound)
        ws.append(w)
        bs.append(b)
    return ws, bs


def pack_params(ws, bs, out_features):
    """One-time host transform: fold omega_0 into sine layers, cast weights to
    bf16, zero-pad the final layer to a lane-dense 256-wide tile, and stack the
    5 post-layer-0 layers."""
    assert out_features <= HIDDEN, "final-layer padding assumes out_features <= 256"

    w0 = (OMEGA_0 * ws[0]).astype(jnp.bfloat16)           # (in, 256)
    b0 = (OMEGA_0 * bs[0]).astype(jnp.float32)            # (1, 256)

    hidden_ws = [(OMEGA_0 * ws[i]).astype(jnp.bfloat16) for i in range(1, 5)]
    hidden_bs = [(OMEGA_0 * bs[i]).astype(jnp.float32) for i in range(1, 5)]

    pad_n = HIDDEN - out_features
    w5 = jnp.pad(ws[5], ((0, 0), (0, pad_n))).astype(jnp.bfloat16)  # (256, 256)
    b5 = jnp.pad(bs[5], ((0, 0), (0, pad_n))).astype(jnp.float32)   # (1, 256)

    wstack = jnp.stack(hidden_ws + [w5], axis=0)          # (5, 256, 256) bf16
    bstack = jnp.stack(hidden_bs + [b5], axis=0)          # (5, 1, 256)  f32
    return w0, b0, wstack, bstack


@partial(jax.jit, static_argnames=("out_features",))
def mp_forward(x, w0, b0, wstack, bstack, out_features):
    # glue: flatten exactly like torch .view(1, -1), cast once to bf16
    x_row = x.reshape(1, -1).astype(jnp.bfloat16)
    # pad the single row up to one sublane tile (cheap, no scatter)
    x_pad = jnp.pad(x_row, ((0, PAD_ROWS - 1), (0, 0)))

    # TODO(synk): if in_features grows so (in_features, 256) bf16 approaches
    # the v7x 64 MiB VMEM budget, tile layer 0 over K with a grid axis +
    # f32 accumulator instead of keeping w0 fully resident.
    vmem = pl.BlockSpec(memory_space=pltpu.MemorySpace.VMEM)

    out = pl.pallas_call(
        siren_mp_kernel,
        out_shape=jax.ShapeDtypeStruct((PAD_ROWS, HIDDEN), jnp.float32),
        in_specs=[vmem, vmem, vmem, vmem, vmem],   # all operands fully resident
        out_specs=vmem,
    )(x_pad, w0, b0, wstack, bstack)

    # glue: real row 0, real output lanes only, then torch .view(-1, 1)
    return out[0, :out_features].reshape(-1, 1)


def reference_forward(x, w0, b0, wstack, bstack, out_features):
    """Pure-JAX reference using the same packed (bf16) parameters and the same
    bf16 input / inter-layer activation quantization as the kernel."""
    h = x.reshape(1, -1).astype(jnp.bfloat16)
    z = jnp.dot(h, w0, preferred_element_type=jnp.float32) + b0
    h = jnp.sin(z).astype(jnp.bfloat16)
    n = wstack.shape[0]
    for i in range(n):
        z = jnp.dot(h, wstack[i], preferred_element_type=jnp.float32) + bstack[i]
        if i < n - 1:
            h = jnp.sin(z).astype(jnp.bfloat16)
    return z[0, :out_features].reshape(-1, 1)


if __name__ == "__main__":
    key = jax.random.PRNGKey(0)
    k_x, k_p = jax.random.split(key)

    # module config: in_features must equal numel(x) because of x.view(1, -1)
    x = jax.random.normal(k_x, (8, 8), jnp.float32)   # in_features = 64
    in_features = x.size
    out_features = 8

    ws, bs = init_siren_params(k_p, in_features, out_features)
    w0, b0, wstack, bstack = pack_params(ws, bs, out_features)

    y = mp_forward(x, w0, b0, wstack, bstack, out_features)
    y = jax.block_until_ready(y)

    y_ref = reference_forward(x, w0, b0, wstack, bstack, out_features)

    assert y.shape == (out_features, 1)
    # Matched-quantization reference: remaining divergence is only ulp-level
    # sin / accumulation-order differences amplified through 5 sine layers.
    assert jnp.allclose(y, y_ref, atol=5e-3, rtol=5e-3)

    print("KERNEL_OK")
</pallas_src>

<mosaic_0001>
module attributes {stable_mosaic.version = 11 : i64} {
  func.func @siren_mp_kernel(%arg0: memref<8x64xbf16, #tpu.memory_space<vmem>>, %arg1: memref<64x256xbf16, #tpu.memory_space<vmem>>, %arg2: memref<1x256xf32, #tpu.memory_space<vmem>>, %arg3: memref<5x256x256xbf16, #tpu.memory_space<vmem>>, %arg4: memref<5x1x256xf32, #tpu.memory_space<vmem>>, %arg5: memref<8x256xf32, #tpu.memory_space<vmem>>) attributes {dimension_semantics = [], scalar_prefetch = 0 : i64, scratch_operands = 0 : i64, tpu.core_type = #tpu.core_type<tc>} {
    %c0 = arith.constant 0 : index
    %c0_0 = arith.constant 0 : index
    %0 = vector.load %arg0[%c0, %c0_0] : memref<8x64xbf16, #tpu.memory_space<vmem>>, vector<8x64xbf16>
    %c0_1 = arith.constant 0 : index
    %c0_2 = arith.constant 0 : index
    %1 = vector.load %arg1[%c0_1, %c0_2] : memref<64x256xbf16, #tpu.memory_space<vmem>>, vector<64x256xbf16>
    %cst = arith.constant dense<0.000000e+00> : vector<8x256xf32>
    %2 = tpu.matmul %0, %1, %cst {dimension_numbers = #tpu.dot_dimension_numbers<[1], [0], [0], [1], [0, 0, 1, 1], [], []>} : vector<8x64xbf16>, vector<64x256xbf16>, vector<8x256xf32> -> vector<8x256xf32>
    %c0_3 = arith.constant 0 : index
    %c0_4 = arith.constant 0 : index
    %3 = vector.load %arg2[%c0_3, %c0_4] : memref<1x256xf32, #tpu.memory_space<vmem>>, vector<1x256xf32>
    %4 = vector.broadcast %3 : vector<1x256xf32> to vector<8x256xf32>
    %5 = arith.addf %2, %4 : vector<8x256xf32>
    %6 = math.sin %5 : vector<8x256xf32>
    %7 = arith.truncf %6 : vector<8x256xf32> to vector<8x256xbf16>
    %c0_5 = arith.constant 0 : index
    %c0_6 = arith.constant 0 : index
    %c0_7 = arith.constant 0 : index
    %8 = vector.load %arg3[%c0_5, %c0_6, %c0_7] : memref<5x256x256xbf16, #tpu.memory_space<vmem>>, vector<1x256x256xbf16>
    %9 = vector.shape_cast %8 : vector<1x256x256xbf16> to vector<256x256xbf16>
    %cst_8 = arith.constant dense<0.000000e+00> : vector<8x256xf32>
    %10 = tpu.matmul %7, %9, %cst_8 {dimension_numbers = #tpu.dot_dimension_numbers<[1], [0], [0], [1], [0, 0, 1, 1], [], []>} : vector<8x256xbf16>, vector<256x256xbf16>, vector<8x256xf32> -> vector<8x256xf32>
    %c0_9 = arith.constant 0 : index
    %c0_10 = arith.constant 0 : index
    %c0_11 = arith.constant 0 : index
    %11 = vector.load %arg4[%c0_9, %c0_10, %c0_11] : memref<5x1x256xf32, #tpu.memory_space<vmem>>, vector<1x1x256xf32>
    %12 = vector.shape_cast %11 : vector<1x1x256xf32> to vector<1x256xf32>
    %13 = vector.broadcast %12 : vector<1x256xf32> to vector<8x256xf32>
    %14 = arith.addf %10, %13 : vector<8x256xf32>
    %15 = math.sin %14 : vector<8x256xf32>
    %16 = arith.truncf %15 : vector<8x256xf32> to vector<8x256xbf16>
    %c1 = arith.constant 1 : index
    %c0_12 = arith.constant 0 : index
    %c0_13 = arith.constant 0 : index
    %17 = vector.load %arg3[%c1, %c0_12, %c0_13] : memref<5x256x256xbf16, #tpu.memory_space<vmem>>, vector<1x256x256xbf16>
    %18 = vector.shape_cast %17 : vector<1x256x256xbf16> to vector<256x256xbf16>
    %cst_14 = arith.constant dense<0.000000e+00> : vector<8x256xf32>
    %19 = tpu.matmul %16, %18, %cst_14 {dimension_numbers = #tpu.dot_dimension_numbers<[1], [0], [0], [1], [0, 0, 1, 1], [], []>} : vector<8x256xbf16>, vector<256x256xbf16>, vector<8x256xf32> -> vector<8x256xf32>
    %c1_15 = arith.constant 1 : index
    %c0_16 = arith.constant 0 : index
    %c0_17 = arith.constant 0 : index
    %20 = vector.load %arg4[%c1_15, %c0_16, %c0_17] : memref<5x1x256xf32, #tpu.memory_space<vmem>>, vector<1x1x256xf32>
    %21 = vector.shape_cast %20 : vector<1x1x256xf32> to vector<1x256xf32>
    %22 = vector.broadcast %21 : vector<1x256xf32> to vector<8x256xf32>
    %23 = arith.addf %19, %22 : vector<8x256xf32>
    %24 = math.sin %23 : vector<8x256xf32>
    %25 = arith.truncf %24 : vector<8x256xf32> to vector<8x256xbf16>
    %c2 = arith.constant 2 : index
    %c0_18 = arith.constant 0 : index
    %c0_19 = arith.constant 0 : index
    %26 = vector.load %arg3[%c2, %c0_18, %c0_19] : memref<5x256x256xbf16, #tpu.memory_space<vmem>>, vector<1x256x256xbf16>
    %27 = vector.shape_cast %26 : vector<1x256x256xbf16> to vector<256x256xbf16>
    %cst_20 = arith.constant dense<0.000000e+00> : vector<8x256xf32>
    %28 = tpu.matmul %25, %27, %cst_20 {dimension_numbers = #tpu.dot_dimension_numbers<[1], [0], [0], [1], [0, 0, 1, 1], [], []>} : vector<8x256xbf16>, vector<256x256xbf16>, vector<8x256xf32> -> vector<8x256xf32>
    %c2_21 = arith.constant 2 : index
    %c0_22 = arith.constant 0 : index
    %c0_23 = arith.constant 0 : index
    %29 = vector.load %arg4[%c2_21, %c0_22, %c0_23] : memref<5x1x256xf32, #tpu.memory_space<vmem>>, vector<1x1x256xf32>
    %30 = vector.shape_cast %29 : vector<1x1x256xf32> to vector<1x256xf32>
    %31 = vector.broadcast %30 : vector<1x256xf32> to vector<8x256xf32>
    %32 = arith.addf %28, %31 : vector<8x256xf32>
    %33 = math.sin %32 : vector<8x256xf32>
    %34 = arith.truncf %33 : vector<8x256xf32> to vector<8x256xbf16>
    %c3 = arith.constant 3 : index
    %c0_24 = arith.constant 0 : index
    %c0_25 = arith.constant 0 : index
    %35 = vector.load %arg3[%c3, %c0_24, %c0_25] : memref<5x256x256xbf16, #tpu.memory_space<vmem>>, vector<1x256x256xbf16>
    %36 = vector.shape_cast %35 : vector<1x256x256xbf16> to vector<256x256xbf16>
    %cst_26 = arith.constant dense<0.000000e+00> : vector<8x256xf32>
    %37 = tpu.matmul %34, %36, %cst_26 {dimension_numbers = #tpu.dot_dimension_numbers<[1], [0], [0], [1], [0, 0, 1, 1], [], []>} : vector<8x256xbf16>, vector<256x256xbf16>, vector<8x256xf32> -> vector<8x256xf32>
    %c3_27 = arith.constant 3 : index
    %c0_28 = arith.constant 0 : index
    %c0_29 = arith.constant 0 : index
    %38 = vector.load %arg4[%c3_27, %c0_28, %c0_29] : memref<5x1x256xf32, #tpu.memory_space<vmem>>, vector<1x1x256xf32>
    %39 = vector.shape_cast %38 : vector<1x1x256xf32> to vector<1x256xf32>
    %40 = vector.broadcast %39 : vector<1x256xf32> to vector<8x256xf32>
    %41 = arith.addf %37, %40 : vector<8x256xf32>
    %42 = math.sin %41 : vector<8x256xf32>
    %43 = arith.truncf %42 : vector<8x256xf32> to vector<8x256xbf16>
    %c4 = arith.constant 4 : index
    %c0_30 = arith.constant 0 : index
    %c0_31 = arith.constant 0 : index
    %44 = vector.load %arg3[%c4, %c0_30, %c0_31] : memref<5x256x256xbf16, #tpu.memory_space<vmem>>, vector<1x256x256xbf16>
    %45 = vector.shape_cast %44 : vector<1x256x256xbf16> to vector<256x256xbf16>
    %cst_32 = arith.constant dense<0.000000e+00> : vector<8x256xf32>
    %46 = tpu.matmul %43, %45, %cst_32 {dimension_numbers = #tpu.dot_dimension_numbers<[1], [0], [0], [1], [0, 0, 1, 1], [], []>} : vector<8x256xbf16>, vector<256x256xbf16>, vector<8x256xf32> -> vector<8x256xf32>
    %c4_33 = arith.constant 4 : index
    %c0_34 = arith.constant 0 : index
    %c0_35 = arith.constant 0 : index
    %47 = vector.load %arg4[%c4_33, %c0_34, %c0_35] : memref<5x1x256xf32, #tpu.memory_space<vmem>>, vector<1x1x256xf32>
    %48 = vector.shape_cast %47 : vector<1x1x256xf32> to vector<1x256xf32>
    %49 = vector.broadcast %48 : vector<1x256xf32> to vector<8x256xf32>
    %50 = arith.addf %46, %49 : vector<8x256xf32>
    %c0_36 = arith.constant 0 : index
    %c0_37 = arith.constant 0 : index
    %51 = vector.load %arg5[%c0_36, %c0_37] : memref<8x256xf32, #tpu.memory_space<vmem>>, vector<8x256xf32>
    tpu.vector_store %arg5[%c0_36, %c0_37], %50 {strides = array<i32>} : memref<8x256xf32, #tpu.memory_space<vmem>>, vector<8x256xf32>,
    return
  }
}

</mosaic_0001>

<llo_original>
// kernel: mp_forward.1
$region0: #{mp_forward.1}
  #allocation0 [shape = 'u32[]', space=smem, size = 0x4, offset = 0x4, fixed_abs, tag = 'smem constant byte address 0x4 - core index']
  #allocation1 [shape = 'u32[144,128]{1,0:T(1,128)}', space=vmem, size = 0x12000, scoped, tag = 'internal scratch']
  %s0 = inlined_call_operand.vmem [shape: bf16[8,64], index: 0, kind: input, shape index: {}]
  %s1 = inlined_call_operand.hbm [shape: bf16[64,256], index: 1, kind: input, shape index: {}]
  %s2 = inlined_call_operand.vmem [shape: f32[1,256], index: 2, kind: input, shape index: {}]
  %s3 = inlined_call_operand.hbm [shape: bf16[5,256,256], index: 3, kind: input, shape index: {}]
  %s4 = inlined_call_operand.vmem [shape: f32[5,1,256], index: 4, kind: input, shape index: {}]
  %s5 = inlined_call_operand.vmem [shape: f32[8,256], index: 5, kind: output, shape index: {}]
  %s6 = sld [smem:[#allocation0]]
  $region38: #{mp_forward.1} parent=0
    _
  %s8 = ssub.s32 1, %s6
  %s9 = scalar_select 0, %s8, %s6
  $region1: #{mp_forward.1} parent=0
    #allocation2 [shape = 'u8[32768]{0}', space=vmem, size = 0x8000, scoped, tag = 'input window, operand 1, single buffered']
    #allocation3 [shape = 's32[1]{0}', space=sflag, size = 0x4, scoped, tag = 'scoped memory for mp_forward.1']
    #allocation4 [shape = 'u8[655360]{0}', space=vmem, size = 0xa0000, scoped, tag = 'input window, operand 3, single buffered']
    #allocation5 [shape = 's32[1]{0}', space=sflag, size = 0x4, scoped, tag = 'scoped memory for mp_forward.1']
    %10 = vsyncpa [#allocation3], 0
    %11 = vsyncpa [#allocation5], 0
    // Predicated region
    $region2: #{mp_forward.1} parent=1 // pred_check
      _
    $region3: #{mp_forward.1} parent=1 // pred_check_branch
      %13 = sbr.rel (0) target = $region5
    $region4: #{mp_forward.1} parent=1 // pred_region
      _
    $region5: #{mp_forward.1} parent=1 // pred_fallthru
      _
    // Predicated region
    $region6: #{mp_forward.1} parent=1 // pred_check
      _
    $region7: #{mp_forward.1} parent=1 // pred_check_branch
      %15 = sbr.rel (0) target = $region9
    $region8: #{mp_forward.1} parent=1 // pred_region
      %s17 = ssub.s32 1024, 1024
      %18 = vsyncadd [#allocation3], %s17
      %s19 = sshll.u32 [#allocation2], 4
      %s20 = int_to_ptr.vmem [resolvable:$true] %s19
      %25 = dma.hbm_to_vmem [thread:$0]  %s1, 1024, %s20, [#allocation3], 128, 128, 8
    $region9: #{mp_forward.1} parent=1 // pred_fallthru
      _
    // Predicated region
    $region10: #{mp_forward.1} parent=1 // pred_check
      _
    $region11: #{mp_forward.1} parent=1 // pred_check_branch
      %27 = sbr.rel (0) target = $region13
    $region12: #{mp_forward.1} parent=1 // pred_region
      _
    $region13: #{mp_forward.1} parent=1 // pred_fallthru
      _
    // Predicated region
    $region14: #{mp_forward.1} parent=1 // pred_check
      _
    $region15: #{mp_forward.1} parent=1 // pred_check_branch
      %29 = sbr.rel (0) target = $region17
    $region16: #{mp_forward.1} parent=1 // pred_region
      %s31 = ssub.s32 20480, 20480
      %32 = vsyncadd [#allocation5], %s31
      %s33 = sshll.u32 [#allocation4], 4
      %s34 = int_to_ptr.vmem [resolvable:$true] %s33
      %39 = dma.hbm_to_vmem [thread:$0]  %s3, 20480, %s34, [#allocation5], 128, 128, 8
    $region17: #{mp_forward.1} parent=1 // pred_fallthru
      _
    // Predicated region
    $region18: #{mp_forward.1} parent=1 // pred_check
      _
    $region19: #{mp_forward.1} parent=1 // pred_check_branch
      %41 = sbr.rel (0) target = $region21
    $region20: #{mp_forward.1} parent=1 // pred_region
      _
    $region21: #{mp_forward.1} parent=1 // pred_fallthru
      _
    // Predicated region
    $region22: #{mp_forward.1} parent=1 // pred_check
      _
    $region23: #{mp_forward.1} parent=1 // pred_check_branch
      %43 = sbr.rel (0) target = $region25
    $region24: #{mp_forward.1} parent=1 // pred_region
      %44 = dma.done [#allocation3], 1024
    $region25: #{mp_forward.1} parent=1 // pred_fallthru
      _
    // Predicated region
    $region26: #{mp_forward.1} parent=1 // pred_check
      _
    $region27: #{mp_forward.1} parent=1 // pred_check_branch
      %46 = sbr.rel (0) target = $region29
    $region28: #{mp_forward.1} parent=1 // pred_region
      %47 = dma.done [#allocation5], 20480
    $region29: #{mp_forward.1} parent=1 // pred_fallthru
      _
    %v49 = vld [vmem:[%s0] sm:$0xf]
    %v50 = vld [vmem:[#allocation2] sm:$0xff]
    %v51 = vld [vmem:[#allocation2 + $0x8] sm:$0xff]
    %v52 = vld [vmem:[#allocation2 + $0x10] sm:$0xff]
    %v53 = vld [vmem:[#allocation2 + $0x18] sm:$0xff]
    %v54 = vld [vmem:[#allocation2 + $0x20] sm:$0xff]
    %v55 = vld [vmem:[#allocation2 + $0x28] sm:$0xff]
    %v56 = vld [vmem:[#allocation2 + $0x30] sm:$0xff]
    %v57 = vld [vmem:[#allocation2 + $0x38] sm:$0xff]
    %v58 = vld [vmem:[%s2] sm:$0x3]
    %v60 = vlaneseq
    %v61 = vshrl.u32 %v60, 7
    %v62 = vsub.s32 0, %v61
    %v63 = vrot.slane %v58, %v62
    %v64 = vlaneseq
    %v65 = vshrl.u32 %v64, 7
    %v66 = vsub.s32 1, %v65
    %v67 = vrot.slane %v58, %v66
    %v78 = vunpack.c.l.b16 %v50
    %v79 = vunpack.c.h.b16 %v50
    %v80 = vunpack.c.l.b16 %v51
    %v81 = vunpack.c.h.b16 %v51
    %v82 = vunpack.c.l.b16 %v52
    %v83 = vunpack.c.h.b16 %v52
    %v84 = vunpack.c.l.b16 %v53
    %v85 = vunpack.c.h.b16 %v53
    %v86 = vunpack.c.l.b16 %v54
    %v87 = vunpack.c.h.b16 %v54
    %v88 = vunpack.c.l.b16 %v55
    %v89 = vunpack.c.h.b16 %v55
    %v90 = vunpack.c.l.b16 %v56
    %v91 = vunpack.c.h.b16 %v56
    %v92 = vunpack.c.l.b16 %v57
    %v93 = vunpack.c.h.b16 %v57
    %v94 = vpack.c.b16 %v80, %v78
    %v95 = vpack.c.b16 %v81, %v79
    %v96 = vpack.c.b16 %v84, %v82
    %v97 = vpack.c.b16 %v85, %v83
    %v98 = vpack.c.b16 %v88, %v86
    %v99 = vpack.c.b16 %v89, %v87
    %v100 = vpack.c.b16 %v92, %v90
    %v101 = vpack.c.b16 %v93, %v91
    %vm110 = vcmask 523264
    %v112 = vsel %vm110, %v49, 0
    %114 = vmatprep.subr.bf16.mxu0 0
    %115 = vmatpush1.bf16.msra.mxu0 0
    %116 = vmatprep.subr.bf16.mxu0 0
    %117 = vmatpush1.bf16.msra.mxu0 0
    %118 = vmatprep.subr.bf16.mxu0 0
    %119 = vmatpush1.bf16.msra.mxu0 0
    %120 = vmatprep.subr.bf16.mxu0 0
    %121 = vmatpush1.bf16.msra.mxu0 0
    %122 = vmatprep.subr.bf16.mxu0 %v101
    %123 = vmatpush1.bf16.msra.mxu0 %v100
    %124 = vmatprep.subr.bf16.mxu0 %v99
    %125 = vmatpush1.bf16.msra.mxu0 %v98
    %126 = vmatprep.subr.bf16.mxu0 %v97
    %127 = vmatpush1.bf16.msra.mxu0 %v96
    %128 = vmatprep.subr.bf16.mxu0 %v95
    %129 = vmatpush1.bf16.msra.mxu0 %v94
    %130 = vmatprep.subr.bf16.mxu0 0
    %131 = vmatpush2.bf16.msra.mxu0 0
    %132 = vmatprep.subr.bf16.mxu0 0
    %133 = vmatpush2.bf16.msra.mxu0 0
    %134 = vmatprep.subr.bf16.mxu0 0
    %135 = vmatpush2.bf16.msra.mxu0 0
    %136 = vmatprep.subr.bf16.mxu0 0
    %137 = vmatpush2.bf16.msra.mxu0 0
    %138 = vmatprep.subr.bf16.mxu0 0
    %139 = vmatpush2.bf16.msra.mxu0 0
    %140 = vmatprep.subr.bf16.mxu0 0
    %141 = vmatpush2.bf16.msra.mxu0 0
    %142 = vmatprep.subr.bf16.mxu0 0
    %143 = vmatpush2.bf16.msra.mxu0 0
    %144 = vmatprep.subr.bf16.mxu0 0
    %145 = vmatpush2.bf16.msra.mxu0 0
    %146 = vmatprep.mubr.bf16.mxu0 0
    %147 = vmatmul.mubr.bf16.gmra.mxu0 %v112
    %v148 = vpop.f32.mrf.mxu0
    %v149 = vadd.f32 %v63, %v148
    %v150 = vpop.f32.mrf.mxu0
    %v151 = vadd.f32 %v67, %v150
    %v152 = vpop.f32.mrf.mxu0
    %v153 = vpop.f32.mrf.mxu0
    %154 = vdwg.mxu0
    %v155 = vand.u32 2147483647, %v149
    %vm156 = vcmp.le.f32.partialorder %v155, 0.7853982
    %vm157 = vcmp.lt.s32.totalorder %v149, 0
    %v158 = vand.u32 %v149, 2139095040
    %v159 = vshrl.u32 %v158, 23
    %v160 = vsub.s32 %v159, 127
    %v161 = vand.u32 2147483647, %v149
    %v162 = vand.u32 %v161, 8388607
    %v163 = vor.u32 %v162, 8388608
    %v164 = vsub.s32 0, %v163
    %v165 = vadd.s32 %v160, 1
    %vm166 = vcmp.gt.s32.totalorder %v165, 0
    %v167 = vsel %vm166, %v165, 0
    %v168 = vshrl.u32 %v167, 5
    %v169 = vand.u32 %v167, 31
    %v170 = vsub.s32 32, %v169
    %v171 = vshrl.u32 683565275, %v170
    %v172 = vshll.u32 683565275, %v169
    %v173 = vshrl.u32 2475754826, %v170
    %v174 = vor.u32 %v172, %v173
    %v175 = vshll.u32 2475754826, %v169
    %v176 = vshrl.u32 2131351028, %v170
    %v177 = vor.u32 %v175, %v176
    %v178 = vshll.u32 2131351028, %v169
    %v179 = vshrl.u32 2102212464, %v170
    %v180 = vor.u32 %v178, %v179
    %v181 = vshll.u32 2102212464, %v169
    %v182 = vshrl.u32 920167782, %v170
    %v183 = vor.u32 %v181, %v182
    %v184 = vshll.u32 920167782, %v169
    %v185 = vshrl.u32 1326507024, %v170
    %v186 = vor.u32 %v184, %v185
    %vm187 = vcmp.lt.s32.totalorder %v168, 1
    %vm188 = vcmp.lt.s32.totalorder %v168, 2
    %vm189 = vcmp.lt.s32.totalorder %v168, 3
    %vm190 = vcmp.lt.s32.totalorder %v168, 4
    %v191 = vsel %vm187, %v171, %v174
    %v192 = vsel %vm190, %v180, 2102212464
    %v193 = vsel %vm189, %v177, %v192
    %v194 = vsel %vm188, %v191, %v193
    %v195 = vsel %vm187, %v174, %v177
    %v196 = vsel %vm190, %v183, 920167782
    %v197 = vsel %vm189, %v180, %v196
    %v198 = vsel %vm188, %v195, %v197
    %v199 = vsel %vm187, %v177, %v180
    %v200 = vsel %vm190, %v186, 1326507024
    %v201 = vsel %vm189, %v183, %v200
    %v202 = vsel %vm188, %v199, %v201
    %v203 = vshll.u32 %v163, 8
    %v204 = vmul.u32.u64.compose %v203, %v202
    %v205 = vextract.low.u32 %v204
    %v206 = vextract.high.u32 %v204
    %v207 = vmul.u32.u64.compose %v203, %v198
    %v208 = vextract.low.u32 %v207
    %v209 = vextract.high.u32 %v207
    %v210 = vmul.u32 %v203, %v194
    %v211 = vadd.s32 %v206, %v208
    %vm212 = vc.u32 %v206, %v208
    %v213 = vadd.s32 %v209, 1
    %v214 = vsel %vm212, %v213, %v209
    %v215 = vadd.s32 %v210, %v214
    %v216 = vadd.s32 %v215, 536870912
    %v217 = vshrl.u32 %v216, 30
    %v218 = vshll.u32 %v217, 30
    %v219 = vsub.s32 %v215, %v218
    %vm220 = vcmp.lt.s32.totalorder %v219, 0
    %v221 = vsub.s32 0, %v219
    %v222 = vsel %vm220, %v221, %v219
    %v223 = vclz %v222
    %v224 = vsub.s32 %v223, 2
    %vm225 = vcmp.gt.s32.totalorder 0, %v224
    %v226 = vsel %vm225, 0, %v224
    %v227 = vsub.s32 32, %v226
    %v228 = vshll.u32 %v219, %v226
    %v229 = vshrl.u32 %v211, %v227
    %v230 = vor.u32 %v228, %v229
    %v231 = vsub.s32 4294967266, %v226
    %v232 = vadd.s32 %v231, 127
    %v233 = vshll.u32 %v232, 23
    %v234 = vor.u32 4788187, %v233
    %v235 = vand.u32 2147483647, %v234
    %v237 = vcvt.s32.f32 %v230
    %v238 = vmul.f32 %v237, %v235
    %v239 = vxor.u32 %v238, 2147483648
    %v240 = vsel %vm157, %v239, %v238
    %v241 = vsub.s32 4, %v217
    %v242 = vsel %vm157, %v241, %v217
    %v243 = vsel %vm156, %v149, %v240
    %v244 = vsel %vm156, 0, %v242
    %v245 = vcosq.f32.pop %v243
    %v246 = vsinq.f32.pop %v243
    %vm247 = vweird.f32 %v149
    %v248 = vadd.s32 %v244, 3
    %v249 = vand.u32 %v248, 3
    %vm250 = vcmp.lt.s32.totalorder %v249, 2
    %vm251 = vcmp.eq.s32.totalorder %v249, 0
    %v252 = vxor.u32 %v246, 2147483648
    %v253 = vsel %vm251, %v245, %v252
    %vm254 = vcmp.eq.s32.totalorder %v249, 2
    %v255 = vxor.u32 %v245, 2147483648
    %v256 = vsel %vm254, %v255, %v246
    %v257 = vsel %vm250, %v253, %v256
    %v258 = vsel %vm247, nan, %v257
    %v259 = vand.u32 2147483647, %v151
    %vm260 = vcmp.le.f32.partialorder %v259, 0.7853982
    %vm261 = vcmp.lt.s32.totalorder %v151, 0
    %v262 = vand.u32 %v151, 2139095040
    %v263 = vshrl.u32 %v262, 23
    %v264 = vsub.s32 %v263, 127
    %v265 = vand.u32 2147483647, %v151
    %v266 = vand.u32 %v265, 8388607
    %v267 = vor.u32 %v266, 8388608
    %v268 = vsub.s32 0, %v267
    %v269 = vadd.s32 %v264, 1
    %vm270 = vcmp.gt.s32.totalorder %v269, 0
    %v271 = vsel %vm270, %v269, 0
    %v272 = vshrl.u32 %v271, 5
    %v273 = vand.u32 %v271, 31
    %v274 = vsub.s32 32, %v273
    %v275 = vshrl.u32 683565275, %v274
    %v276 = vshll.u32 683565275, %v273
    %v277 = vshrl.u32 2475754826, %v274
    %v278 = vor.u32 %v276, %v277
    %v279 = vshll.u32 2475754826, %v273
    %v280 = vshrl.u32 2131351028, %v274
    %v281 = vor.u32 %v279, %v280
    %v282 = vshll.u32 2131351028, %v273
    %v283 = vshrl.u32 2102212464, %v274
    %v284 = vor.u32 %v282, %v283
    %v285 = vshll.u32 2102212464, %v273
    %v286 = vshrl.u32 920167782, %v274
    %v287 = vor.u32 %v285, %v286
    %v288 = vshll.u32 920167782, %v273
    %v289 = vshrl.u32 1326507024, %v274
    %v290 = vor.u32 %v288, %v289
    %vm291 = vcmp.lt.s32.totalorder %v272, 1
    %vm292 = vcmp.lt.s32.totalorder %v272, 2
    %vm293 = vcmp.lt.s32.totalorder %v272, 3
    %vm294 = vcmp.lt.s32.totalorder %v272, 4
    %v295 = vsel %vm291, %v275, %v278
    %v296 = vsel %vm294, %v284, 2102212464
    %v297 = vsel %vm293, %v281, %v296
    %v298 = vsel %vm292, %v295, %v297
    %v299 = vsel %vm291, %v278, %v281
    %v300 = vsel %vm294, %v287, 920167782
    %v301 = vsel %vm293, %v284, %v300
    %v302 = vsel %vm292, %v299, %v301
    %v303 = vsel %vm291, %v281, %v284
    %v304 = vsel %vm294, %v290, 1326507024
    %v305 = vsel %vm293, %v287, %v304
    %v306 = vsel %vm292, %v303, %v305
    %v307 = vshll.u32 %v267, 8
    %v308 = vmul.u32.u64.compose %v307, %v306
    %v309 = vextract.low.u32 %v308
    %v310 = vextract.high.u32 %v308
    %v311 = vmul.u32.u64.compose %v307, %v302
    %v312 = vextract.low.u32 %v311
    %v313 = vextract.high.u32 %v311
    %v314 = vmul.u32 %v307, %v298
    %v315 = vadd.s32 %v310, %v312
    %vm316 = vc.u32 %v310, %v312
    %v317 = vadd.s32 %v313, 1
    %v318 = vsel %vm316, %v317, %v313
    %v319 = vadd.s32 %v314, %v318
    %v320 = vadd.s32 %v319, 536870912
    %v321 = vshrl.u32 %v320, 30
    %v322 = vshll.u32 %v321, 30
    %v323 = vsub.s32 %v319, %v322
    %vm324 = vcmp.lt.s32.totalorder %v323, 0
    %v325 = vsub.s32 0, %v323
    %v326 = vsel %vm324, %v325, %v323
    %v327 = vclz %v326
    %v328 = vsub.s32 %v327, 2
    %vm329 = vcmp.gt.s32.totalorder 0, %v328
    %v330 = vsel %vm329, 0, %v328
    %v331 = vsub.s32 32, %v330
    %v332 = vshll.u32 %v323, %v330
    %v333 = vshrl.u32 %v315, %v331
    %v334 = vor.u32 %v332, %v333
    %v335 = vsub.s32 4294967266, %v330
    %v336 = vadd.s32 %v335, 127
    %v337 = vshll.u32 %v336, 23
    %v338 = vor.u32 4788187, %v337
    %v339 = vand.u32 2147483647, %v338
    %v341 = vcvt.s32.f32 %v334
    %v342 = vmul.f32 %v341, %v339
    %v343 = vxor.u32 %v342, 2147483648
    %v344 = vsel %vm261, %v343, %v342
    %v345 = vsub.s32 4, %v321
    %v346 = vsel %vm261, %v345, %v321
    %v347 = vsel %vm260, %v151, %v344
    %v348 = vsel %vm260, 0, %v346
    %v349 = vcosq.f32.pop %v347
    %v350 = vsinq.f32.pop %v347
    %vm351 = vweird.f32 %v151
    %v352 = vadd.s32 %v348, 3
    %v353 = vand.u32 %v352, 3
    %vm354 = vcmp.lt.s32.totalorder %v353, 2
    %vm355 = vcmp.eq.s32.totalorder %v353, 0
    %v356 = vxor.u32 %v350, 2147483648
    %v357 = vsel %vm355, %v349, %v356
    %vm358 = vcmp.eq.s32.totalorder %v353, 2
    %v359 = vxor.u32 %v349, 2147483648
    %v360 = vsel %vm358, %v359, %v350
    %v361 = vsel %vm354, %v357, %v360
    %v362 = vsel %vm351, nan, %v361
    %v363 = vpack.c.bf16 %v258, %v258
    %v364 = vpack.c.bf16 %v362, %v362
    %v365 = vld [vmem:[#allocation4] sm:$0xff]
    %v366 = vld [vmem:[#allocation4 + $0x8] sm:$0xff]
    %v367 = vld [vmem:[#allocation4 + $0x10] sm:$0xff]
    %v368 = vld [vmem:[#allocation4 + $0x18] sm:$0xff]
    %v369 = vld [vmem:[#allocation4 + $0x20] sm:$0xff]
    %v370 = vld [vmem:[#allocation4 + $0x28] sm:$0xff]
    %v371 = vld [vmem:[#allocation4 + $0x30] sm:$0xff]
    %v372 = vld [vmem:[#allocation4 + $0x38] sm:$0xff]
    %v373 = vld [vmem:[#allocation4 + $0x40] sm:$0xff]
    %v374 = vld [vmem:[#allocation4 + $0x48] sm:$0xff]
    %v375 = vld [vmem:[#allocation4 + $0x50] sm:$0xff]
    %v376 = vld [vmem:[#allocation4 + $0x58] sm:$0xff]
    %v377 = vld [vmem:[#allocation4 + $0x60] sm:$0xff]
    %v378 = vld [vmem:[#allocation4 + $0x68] sm:$0xff]
    %v379 = vld [vmem:[#allocation4 + $0x70] sm:$0xff]
    %v380 = vld [vmem:[#allocation4 + $0x78] sm:$0xff]
    %v381 = vld [vmem:[#allocation4 + $0x80] sm:$0xff]
    %v382 = vld [vmem:[#allocation4 + $0x88] sm:$0xff]
    %v383 = vld [vmem:[#allocation4 + $0x90] sm:$0xff]
    %v384 = vld [vmem:[#allocation4 + $0x98] sm:$0xff]
    %v385 = vld [vmem:[#allocation4 + $0xa0] sm:$0xff]
    %v386 = vld [vmem:[#allocation4 + $0xa8] sm:$0xff]
    %v387 = vld [vmem:[#allocation4 + $0xb0] sm:$0xff]
    %v388 = vld [vmem:[#allocation4 + $0xb8] sm:$0xff]
    %v389 = vld [vmem:[#allocation4 + $0xc0] sm:$0xff]
    %v390 = vld [vmem:[#allocation4 + $0xc8] sm:$0xff]
    %v391 = vld [vmem:[#allocation4 + $0xd0] sm:$0xff]
    %v392 = vld [vmem:[#allocation4 + $0xd8] sm:$0xff]
    %v393 = vld [vmem:[#allocation4 + $0xe0] sm:$0xff]
    %v394 = vld [vmem:[#allocation4 + $0xe8] sm:$0xff]
    %v395 = vld [vmem:[#allocation4 + $0xf0] sm:$0xff]
    %v396 = vld [vmem:[#allocation4 + $0xf8] sm:$0xff]
    %v397 = vld [vmem:[%s4] sm:$0x3]
    %v399 = vlaneseq
    %v400 = vshrl.u32 %v399, 7
    %v401 = vsub.s32 0, %v400
    %v402 = vrot.slane %v397, %v401
    %v403 = vlaneseq
    %v404 = vshrl.u32 %v403, 7
    %v405 = vsub.s32 1, %v404
    %v406 = vrot.slane %v397, %v405
    %v441 = vunpack.c.l.b16 %v365
    %v442 = vunpack.c.h.b16 %v365
    %v443 = vunpack.c.l.b16 %v366
    %v444 = vunpack.c.h.b16 %v366
    %v445 = vunpack.c.l.b16 %v367
    %v446 = vunpack.c.h.b16 %v367
    %v447 = vunpack.c.l.b16 %v368
    %v448 = vunpack.c.h.b16 %v368
    %v449 = vunpack.c.l.b16 %v369
    %v450 = vunpack.c.h.b16 %v369
    %v451 = vunpack.c.l.b16 %v370
    %v452 = vunpack.c.h.b16 %v370
    %v453 = vunpack.c.l.b16 %v371
    %v454 = vunpack.c.h.b16 %v371
    %v455 = vunpack.c.l.b16 %v372
    %v456 = vunpack.c.h.b16 %v372
    %v457 = vunpack.c.l.b16 %v373
    %v458 = vunpack.c.h.b16 %v373
    %v459 = vunpack.c.l.b16 %v374
    %v460 = vunpack.c.h.b16 %v374
    %v461 = vunpack.c.l.b16 %v375
    %v462 = vunpack.c.h.b16 %v375
    %v463 = vunpack.c.l.b16 %v376
    %v464 = vunpack.c.h.b16 %v376
    %v465 = vunpack.c.l.b16 %v377
    %v466 = vunpack.c.h.b16 %v377
    %v467 = vunpack.c.l.b16 %v378
    %v468 = vunpack.c.h.b16 %v378
    %v469 = vunpack.c.l.b16 %v379
    %v470 = vunpack.c.h.b16 %v379
    %v471 = vunpack.c.l.b16 %v380
    %v472 = vunpack.c.h.b16 %v380
    %v473 = vunpack.c.l.b16 %v381
    %v474 = vunpack.c.h.b16 %v381
    %v475 = vunpack.c.l.b16 %v382
    %v476 = vunpack.c.h.b16 %v382
    %v477 = vunpack.c.l.b16 %v383
    %v478 = vunpack.c.h.b16 %v383
    %v479 = vunpack.c.l.b16 %v384
    %v480 = vunpack.c.h.b16 %v384
    %v481 = vunpack.c.l.b16 %v385
    %v482 = vunpack.c.h.b16 %v385
    %v483 = vunpack.c.l.b16 %v386
    %v484 = vunpack.c.h.b16 %v386
    %v485 = vunpack.c.l.b16 %v387
    %v486 = vunpack.c.h.b16 %v387
    %v487 = vunpack.c.l.b16 %v388
    %v488 = vunpack.c.h.b16 %v388
    %v489 = vunpack.c.l.b16 %v389
    %v490 = vunpack.c.h.b16 %v389
    %v491 = vunpack.c.l.b16 %v390
    %v492 = vunpack.c.h.b16 %v390
    %v493 = vunpack.c.l.b16 %v391
    %v494 = vunpack.c.h.b16 %v391
    %v495 = vunpack.c.l.b16 %v392
    %v496 = vunpack.c.h.b16 %v392
    %v497 = vunpack.c.l.b16 %v393
    %v498 = vunpack.c.h.b16 %v393
    %v499 = vunpack.c.l.b16 %v394
    %v500 = vunpack.c.h.b16 %v394
    %v501 = vunpack.c.l.b16 %v395
    %v502 = vunpack.c.h.b16 %v395
    %v503 = vunpack.c.l.b16 %v396
    %v504 = vunpack.c.h.b16 %v396
    %v505 = vpack.c.b16 %v443, %v441
    %v506 = vpack.c.b16 %v444, %v442
    %v507 = vpack.c.b16 %v447, %v445
    %v508 = vpack.c.b16 %v448, %v446
    %v509 = vpack.c.b16 %v451, %v449
    %v510 = vpack.c.b16 %v452, %v450
    %v511 = vpack.c.b16 %v455, %v453
    %v512 = vpack.c.b16 %v456, %v454
    %v513 = vpack.c.b16 %v459, %v457
    %v514 = vpack.c.b16 %v460, %v458
    %v515 = vpack.c.b16 %v463, %v461
    %v516 = vpack.c.b16 %v464, %v462
    %v517 = vpack.c.b16 %v467, %v465
    %v518 = vpack.c.b16 %v468, %v466
    %v519 = vpack.c.b16 %v471, %v469
    %v520 = vpack.c.b16 %v472, %v470
    %v521 = vpack.c.b16 %v475, %v473
    %v522 = vpack.c.b16 %v476, %v474
    %v523 = vpack.c.b16 %v479, %v477
    %v524 = vpack.c.b16 %v480, %v478
    %v525 = vpack.c.b16 %v483, %v481
    %v526 = vpack.c.b16 %v484, %v482
    %v527 = vpack.c.b16 %v487, %v485
    %v528 = vpack.c.b16 %v488, %v486
    %v529 = vpack.c.b16 %v491, %v489
    %v530 = vpack.c.b16 %v492, %v490
    %v531 = vpack.c.b16 %v495, %v493
    %v532 = vpack.c.b16 %v496, %v494
    %v533 = vpack.c.b16 %v499, %v497
    %v534 = vpack.c.b16 %v500, %v498
    %v535 = vpack.c.b16 %v503, %v501
    %v536 = vpack.c.b16 %v504, %v502
    %569 = vmatprep.subr.bf16.mxu0 %v520
    %570 = vmatpush1.bf16.msra.mxu0 %v519
    %571 = vmatprep.subr.bf16.mxu0 %v518
    %572 = vmatpush1.bf16.msra.mxu0 %v517
    %573 = vmatprep.subr.bf16.mxu0 %v516
    %574 = vmatpush1.bf16.msra.mxu0 %v515
    %575 = vmatprep.subr.bf16.mxu0 %v514
    %576 = vmatpush1.bf16.msra.mxu0 %v513
    %577 = vmatprep.subr.bf16.mxu0 %v512
    %578 = vmatpush1.bf16.msra.mxu0 %v511
    %579 = vmatprep.subr.bf16.mxu0 %v510
    %580 = vmatpush1.bf16.msra.mxu0 %v509
    %581 = vmatprep.subr.bf16.mxu0 %v508
    %582 = vmatpush1.bf16.msra.mxu0 %v507
    %583 = vmatprep.subr.bf16.mxu0 %v506
    %584 = vmatpush1.bf16.msra.mxu0 %v505
    %585 = vmatprep.subr.bf16.mxu0 %v536
    %586 = vmatpush2.bf16.msra.mxu0 %v535
    %587 = vmatprep.subr.bf16.mxu0 %v534
    %588 = vmatpush2.bf16.msra.mxu0 %v533
    %589 = vmatprep.subr.bf16.mxu0 %v532
    %590 = vmatpush2.bf16.msra.mxu0 %v531
    %591 = vmatprep.subr.bf16.mxu0 %v530
    %592 = vmatpush2.bf16.msra.mxu0 %v529
    %593 = vmatprep.subr.bf16.mxu0 %v528
    %594 = vmatpush2.bf16.msra.mxu0 %v527
    %595 = vmatprep.subr.bf16.mxu0 %v526
    %596 = vmatpush2.bf16.msra.mxu0 %v525
    %597 = vmatprep.subr.bf16.mxu0 %v524
    %598 = vmatpush2.bf16.msra.mxu0 %v523
    %599 = vmatprep.subr.bf16.mxu0 %v522
    %600 = vmatpush2.bf16.msra.mxu0 %v521
    %601 = vmatprep.mubr.bf16.mxu0 %v364
    %602 = vmatmul.mubr.bf16.gmra.mxu0 %v363
    %v603 = vpop.f32.mrf.mxu0
    %v604 = vadd.f32 %v402, %v603
    %v605 = vpop.f32.mrf.mxu0
    %v606 = vadd.f32 %v406, %v605
    %v607 = vpop.f32.mrf.mxu0
    %v608 = vpop.f32.mrf.mxu0
    %609 = vdwg.mxu0
    %v610 = vand.u32 2147483647, %v604
    %vm611 = vcmp.le.f32.partialorder %v610, 0.7853982
    %vm612 = vcmp.lt.s32.totalorder %v604, 0
    %v613 = vand.u32 %v604, 2139095040
    %v614 = vshrl.u32 %v613, 23
    %v615 = vsub.s32 %v614, 127
    %v616 = vand.u32 2147483647, %v604
    %v617 = vand.u32 %v616, 8388607
    %v618 = vor.u32 %v617, 8388608
    %v619 = vsub.s32 0, %v618
    %v620 = vadd.s32 %v615, 1
    %vm621 = vcmp.gt.s32.totalorder %v620, 0
    %v622 = vsel %vm621, %v620, 0
    %v623 = vshrl.u32 %v622, 5
    %v624 = vand.u32 %v622, 31
    %v625 = vsub.s32 32, %v624
    %v626 = vshrl.u32 683565275, %v625
    %v627 = vshll.u32 683565275, %v624
    %v628 = vshrl.u32 2475754826, %v625
    %v629 = vor.u32 %v627, %v628
    %v630 = vshll.u32 2475754826, %v624
    %v631 = vshrl.u32 2131351028, %v625
    %v632 = vor.u32 %v630, %v631
    %v633 = vshll.u32 2131351028, %v624
    %v634 = vshrl.u32 2102212464, %v625
    %v635 = vor.u32 %v633, %v634
    %v636 = vshll.u32 2102212464, %v624
    %v637 = vshrl.u32 920167782, %v625
    %v638 = vor.u32 %v636, %v637
    %v639 = vshll.u32 920167782, %v624
    %v640 = vshrl.u32 1326507024, %v625
    %v641 = vor.u32 %v639, %v640
    %vm642 = vcmp.lt.s32.totalorder %v623, 1
    %vm643 = vcmp.lt.s32.totalorder %v623, 2
    %vm644 = vcmp.lt.s32.totalorder %v623, 3
    %vm645 = vcmp.lt.s32.totalorder %v623, 4
    %v646 = vsel %vm642, %v626, %v629
    %v647 = vsel %vm645, %v635, 2102212464
    %v648 = vsel %vm644, %v632, %v647
    %v649 = vsel %vm643, %v646, %v648
    %v650 = vsel %vm642, %v629, %v632
    %v651 = vsel %vm645, %v638, 920167782
    %v652 = vsel %vm644, %v635, %v651
    %v653 = vsel %vm643, %v650, %v652
    %v654 = vsel %vm642, %v632, %v635
    %v655 = vsel %vm645, %v641, 1326507024
    %v656 = vsel %vm644, %v638, %v655
    %v657 = vsel %vm643, %v654, %v656
    %v658 = vshll.u32 %v618, 8
    %v659 = vmul.u32.u64.compose %v658, %v657
    %v660 = vextract.low.u32 %v659
    %v661 = vextract.high.u32 %v659
    %v662 = vmul.u32.u64.compose %v658, %v653
    %v663 = vextract.low.u32 %v662
    %v664 = vextract.high.u32 %v662
    %v665 = vmul.u32 %v658, %v649
    %v666 = vadd.s32 %v661, %v663
    %vm667 = vc.u32 %v661, %v663
    %v668 = vadd.s32 %v664, 1
    %v669 = vsel %vm667, %v668, %v664
    %v670 = vadd.s32 %v665, %v669
    %v671 = vadd.s32 %v670, 536870912
    %v672 = vshrl.u32 %v671, 30
    %v673 = vshll.u32 %v672, 30
    %v674 = vsub.s32 %v670, %v673
    %vm675 = vcmp.lt.s32.totalorder %v674, 0
    %v676 = vsub.s32 0, %v674
    %v677 = vsel %vm675, %v676, %v674
    %v678 = vclz %v677
    %v679 = vsub.s32 %v678, 2
    %vm680 = vcmp.gt.s32.totalorder 0, %v679
    %v681 = vsel %vm680, 0, %v679
    %v682 = vsub.s32 32, %v681
    %v683 = vshll.u32 %v674, %v681
    %v684 = vshrl.u32 %v666, %v682
    %v685 = vor.u32 %v683, %v684
    %v686 = vsub.s32 4294967266, %v681
    %v687 = vadd.s32 %v686, 127
    %v688 = vshll.u32 %v687, 23
    %v689 = vor.u32 4788187, %v688
    %v690 = vand.u32 2147483647, %v689
    %v692 = vcvt.s32.f32 %v685
    %v693 = vmul.f32 %v692, %v690
    %v694 = vxor.u32 %v693, 2147483648
    %v695 = vsel %vm612, %v694, %v693
    %v696 = vsub.s32 4, %v672
    %v697 = vsel %vm612, %v696, %v672
    %v698 = vsel %vm611, %v604, %v695
    %v699 = vsel %vm611, 0, %v697
    %v700 = vcosq.f32.pop %v698
    %v701 = vsinq.f32.pop %v698
    %vm702 = vweird.f32 %v604
    %v703 = vadd.s32 %v699, 3
    %v704 = vand.u32 %v703, 3
    %vm705 = vcmp.lt.s32.totalorder %v704, 2
    %vm706 = vcmp.eq.s32.totalorder %v704, 0
    %v707 = vxor.u32 %v701, 2147483648
    %v708 = vsel %vm706, %v700, %v707
    %vm709 = vcmp.eq.s32.totalorder %v704, 2
    %v710 = vxor.u32 %v700, 2147483648
    %v711 = vsel %vm709, %v710, %v701
    %v712 = vsel %vm705, %v708, %v711
    %v713 = vsel %vm702, nan, %v712
    %v714 = vand.u32 2147483647, %v606
    %vm715 = vcmp.le.f32.partialorder %v714, 0.7853982
    %vm716 = vcmp.lt.s32.totalorder %v606, 0
    %v717 = vand.u32 %v606, 2139095040
    %v718 = vshrl.u32 %v717, 23
    %v719 = vsub.s32 %v718, 127
    %v720 = vand.u32 2147483647, %v606
    %v721 = vand.u32 %v720, 8388607
    %v722 = vor.u32 %v721, 8388608
    %v723 = vsub.s32 0, %v722
    %v724 = vadd.s32 %v719, 1
    %vm725 = vcmp.gt.s32.totalorder %v724, 0
    %v726 = vsel %vm725, %v724, 0
    %v727 = vshrl.u32 %v726, 5
    %v728 = vand.u32 %v726, 31
    %v729 = vsub.s32 32, %v728
    %v730 = vshrl.u32 683565275, %v729
    %v731 = vshll.u32 683565275, %v728
    %v732 = vshrl.u32 2475754826, %v729
    %v733 = vor.u32 %v731, %v732
    %v734 = vshll.u32 2475754826, %v728
    %v735 = vshrl.u32 2131351028, %v729
    %v736 = vor.u32 %v734, %v735
    %v737 = vshll.u32 2131351028, %v728
    %v738 = vshrl.u32 2102212464, %v729
    %v739 = vor.u32 %v737, %v738
    %v740 = vshll.u32 2102212464, %v728
    %v741 = vshrl.u32 920167782, %v729
    %v742 = vor.u32 %v740, %v741
    %v743 = vshll.u32 920167782, %v728
    %v744 = vshrl.u32 1326507024, %v729
    %v745 = vor.u32 %v743, %v744
    %vm746 = vcmp.lt.s32.totalorder %v727, 1
    %vm747 = vcmp.lt.s32.totalorder %v727, 2
    %vm748 = vcmp.lt.s32.totalorder %v727, 3
    %vm749 = vcmp.lt.s32.totalorder %v727, 4
    %v750 = vsel %vm746, %v730, %v733
    %v751 = vsel %vm749, %v739, 2102212464
    %v752 = vsel %vm748, %v736, %v751
    %v753 = vsel %vm747, %v750, %v752
    %v754 = vsel %vm746, %v733, %v736
    %v755 = vsel %vm749, %v742, 920167782
    %v756 = vsel %vm748, %v739, %v755
    %v757 = vsel %vm747, %v754, %v756
    %v758 = vsel %vm746, %v736, %v739
    %v759 = vsel %vm749, %v745, 1326507024
    %v760 = vsel %vm748, %v742, %v759
    %v761 = vsel %vm747, %v758, %v760
    %v762 = vshll.u32 %v722, 8
    %v763 = vmul.u32.u64.compose %v762, %v761
    %v764 = vextract.low.u32 %v763
    %v765 = vextract.high.u32 %v763
    %v766 = vmul.u32.u64.compose %v762, %v757
    %v767 = vextract.low.u32 %v766
    %v768 = vextract.high.u32 %v766
    %v769 = vmul.u32 %v762, %v753
    %v770 = vadd.s32 %v765, %v767
    %vm771 = vc.u32 %v765, %v767
    %v772 = vadd.s32 %v768, 1
    %v773 = vsel %vm771, %v772, %v768
    %v774 = vadd.s32 %v769, %v773
    %v775 = vadd.s32 %v774, 536870912
    %v776 = vshrl.u32 %v775, 30
    %v777 = vshll.u32 %v776, 30
    %v778 = vsub.s32 %v774, %v777
    %vm779 = vcmp.lt.s32.totalorder %v778, 0
    %v780 = vsub.s32 0, %v778
    %v781 = vsel %vm779, %v780, %v778
    %v782 = vclz %v781
    %v783 = vsub.s32 %v782, 2
    %vm784 = vcmp.gt.s32.totalorder 0, %v783
    %v785 = vsel %vm784, 0, %v783
    %v786 = vsub.s32 32, %v785
    %v787 = vshll.u32 %v778, %v785
    %v788 = vshrl.u32 %v770, %v786
    %v789 = vor.u32 %v787, %v788
    %v790 = vsub.s32 4294967266, %v785
    %v791 = vadd.s32 %v790, 127
    %v792 = vshll.u32 %v791, 23
    %v793 = vor.u32 4788187, %v792
    %v794 = vand.u32 2147483647, %v793
    %v796 = vcvt.s32.f32 %v789
    %v797 = vmul.f32 %v796, %v794
    %v798 = vxor.u32 %v797, 2147483648
    %v799 = vsel %vm716, %v798, %v797
    %v800 = vsub.s32 4, %v776
    %v801 = vsel %vm716, %v800, %v776
    %v802 = vsel %vm715, %v606, %v799
    %v803 = vsel %vm715, 0, %v801
    %v804 = vcosq.f32.pop %v802
    %v805 = vsinq.f32.pop %v802
    %vm806 = vweird.f32 %v606
    %v807 = vadd.s32 %v803, 3
    %v808 = vand.u32 %v807, 3
    %vm809 = vcmp.lt.s32.totalorder %v808, 2
    %vm810 = vcmp.eq.s32.totalorder %v808, 0
    %v811 = vxor.u32 %v805, 2147483648
    %v812 = vsel %vm810, %v804, %v811
    %vm813 = vcmp.eq.s32.totalorder %v808, 2
    %v814 = vxor.u32 %v804, 2147483648
    %v815 = vsel %vm813, %v814, %v805
    %v816 = vsel %vm809, %v812, %v815
    %v817 = vsel %vm806, nan, %v816
    %v818 = vpack.c.bf16 %v713, %v713
    %v819 = vpack.c.bf16 %v817, %v817
    %s820 = scalar_lea.vmem [#allocation4], 256
    %v821 = vld [vmem:[%s820] sm:$0xff]
    %v822 = vld [vmem:[%s820 + $0x8] sm:$0xff]
    %v823 = vld [vmem:[%s820 + $0x10] sm:$0xff]
    %v824 = vld [vmem:[%s820 + $0x18] sm:$0xff]
    %v825 = vld [vmem:[%s820 + $0x20] sm:$0xff]
    %v826 = vld [vmem:[%s820 + $0x28] sm:$0xff]
    %v827 = vld [vmem:[%s820 + $0x30] sm:$0xff]
    %v828 = vld [vmem:[%s820 + $0x38] sm:$0xff]
    %v829 = vld [vmem:[%s820 + $0x40] sm:$0xff]
    %v830 = vld [vmem:[%s820 + $0x48] sm:$0xff]
    %v831 = vld [vmem:[%s820 + $0x50] sm:$0xff]
    %v832 = vld [vmem:[%s820 + $0x58] sm:$0xff]
    %v833 = vld [vmem:[%s820 + $0x60] sm:$0xff]
    %v834 = vld [vmem:[%s820 + $0x68] sm:$0xff]
    %v835 = vld [vmem:[%s820 + $0x70] sm:$0xff]
    %v836 = vld [vmem:[%s820 + $0x78] sm:$0xff]
    %v837 = vld [vmem:[%s820 + $0x80] sm:$0xff]
    %v838 = vld [vmem:[%s820 + $0x88] sm:$0xff]
    %v839 = vld [vmem:[%s820 + $0x90] sm:$0xff]
    %v840 = vld [vmem:[%s820 + $0x98] sm:$0xff]
    %v841 = vld [vmem:[%s820 + $0xa0] sm:$0xff]
    %v842 = vld [vmem:[%s820 + $0xa8] sm:$0xff]
    %v843 = vld [vmem:[%s820 + $0xb0] sm:$0xff]
    %v844 = vld [vmem:[%s820 + $0xb8] sm:$0xff]
    %v845 = vld [vmem:[%s820 + $0xc0] sm:$0xff]
    %v846 = vld [vmem:[%s820 + $0xc8] sm:$0xff]
    %v847 = vld [vmem:[%s820 + $0xd0] sm:$0xff]
    %v848 = vld [vmem:[%s820 + $0xd8] sm:$0xff]
    %v849 = vld [vmem:[%s820 + $0xe0] sm:$0xff]
    %v850 = vld [vmem:[%s820 + $0xe8] sm:$0xff]
    %v851 = vld [vmem:[%s820 + $0xf0] sm:$0xff]
    %v852 = vld [vmem:[%s820 + $0xf8] sm:$0xff]
    %s853 = scalar_lea.vmem %s4, 2
    %v854 = vld [vmem:[%s853] sm:$0x3]
    %v856 = vlaneseq
    %v857 = vshrl.u32 %v856, 7
    %v858 = vsub.s32 0, %v857
    %v859 = vrot.slane %v854, %v858
    %v860 = vlaneseq
    %v861 = vshrl.u32 %v860, 7
    %v862 = vsub.s32 1, %v861
    %v863 = vrot.slane %v854, %v862
    %v898 = vunpack.c.l.b16 %v821
    %v899 = vunpack.c.h.b16 %v821
    %v900 = vunpack.c.l.b16 %v822
    %v901 = vunpack.c.h.b16 %v822
    %v902 = vunpack.c.l.b16 %v823
    %v903 = vunpack.c.h.b16 %v823
    %v904 = vunpack.c.l.b16 %v824
    %v905 = vunpack.c.h.b16 %v824
    %v906 = vunpack.c.l.b16 %v825
    %v907 = vunpack.c.h.b16 %v825
    %v908 = vunpack.c.l.b16 %v826
    %v909 = vunpack.c.h.b16 %v826
    %v910 = vunpack.c.l.b16 %v827
    %v911 = vunpack.c.h.b16 %v827
    %v912 = vunpack.c.l.b16 %v828
    %v913 = vunpack.c.h.b16 %v828
    %v914 = vunpack.c.l.b16 %v829
    %v915 = vunpack.c.h.b16 %v829
    %v916 = vunpack.c.l.b16 %v830
    %v917 = vunpack.c.h.b16 %v830
    %v918 = vunpack.c.l.b16 %v831
    %v919 = vunpack.c.h.b16 %v831
    %v920 = vunpack.c.l.b16 %v832
    %v921 = vunpack.c.h.b16 %v832
    %v922 = vunpack.c.l.b16 %v833
    %v923 = vunpack.c.h.b16 %v833
    %v924 = vunpack.c.l.b16 %v834
    %v925 = vunpack.c.h.b16 %v834
    %v926 = vunpack.c.l.b16 %v835
    %v927 = vunpack.c.h.b16 %v835
    %v928 = vunpack.c.l.b16 %v836
    %v929 = vunpack.c.h.b16 %v836
    %v930 = vunpack.c.l.b16 %v837
    %v931 = vunpack.c.h.b16 %v837
    %v932 = vunpack.c.l.b16 %v838
    %v933 = vunpack.c.h.b16 %v838
    %v934 = vunpack.c.l.b16 %v839
    %v935 = vunpack.c.h.b16 %v839
    %v936 = vunpack.c.l.b16 %v840
    %v937 = vunpack.c.h.b16 %v840
    %v938 = vunpack.c.l.b16 %v841
    %v939 = vunpack.c.h.b16 %v841
    %v940 = vunpack.c.l.b16 %v842
    %v941 = vunpack.c.h.b16 %v842
    %v942 = vunpack.c.l.b16 %v843
    %v943 = vunpack.c.h.b16 %v843
    %v944 = vunpack.c.l.b16 %v844
    %v945 = vunpack.c.h.b16 %v844
    %v946 = vunpack.c.l.b16 %v845
    %v947 = vunpack.c.h.b16 %v845
    %v948 = vunpack.c.l.b16 %v846
    %v949 = vunpack.c.h.b16 %v846
    %v950 = vunpack.c.l.b16 %v847
    %v951 = vunpack.c.h.b16 %v847
    %v952 = vunpack.c.l.b16 %v848
    %v953 = vunpack.c.h.b16 %v848
    %v954 = vunpack.c.l.b16 %v849
    %v955 = vunpack.c.h.b16 %v849
    %v956 = vunpack.c.l.b16 %v850
    %v957 = vunpack.c.h.b16 %v850
    %v958 = vunpack.c.l.b16 %v851
    %v959 = vunpack.c.h.b16 %v851
    %v960 = vunpack.c.l.b16 %v852
    %v961 = vunpack.c.h.b16 %v852
    %v962 = vpack.c.b16 %v900, %v898
    %v963 = vpack.c.b16 %v901, %v899
    %v964 = vpack.c.b16 %v904, %v902
    %v965 = vpack.c.b16 %v905, %v903
    %v966 = vpack.c.b16 %v908, %v906
    %v967 = vpack.c.b16 %v909, %v907
    %v968 = vpack.c.b16 %v912, %v910
    %v969 = vpack.c.b16 %v913, %v911
    %v970 = vpack.c.b16 %v916, %v914
    %v971 = vpack.c.b16 %v917, %v915
    %v972 = vpack.c.b16 %v920, %v918
    %v973 = vpack.c.b16 %v921, %v919
    %v974 = vpack.c.b16 %v924, %v922
    %v975 = vpack.c.b16 %v925, %v923
    %v976 = vpack.c.b16 %v928, %v926
    %v977 = vpack.c.b16 %v929, %v927
    %v978 = vpack.c.b16 %v932, %v930
    %v979 = vpack.c.b16 %v933, %v931
    %v980 = vpack.c.b16 %v936, %v934
    %v981 = vpack.c.b16 %v937, %v935
    %v982 = vpack.c.b16 %v940, %v938
    %v983 = vpack.c.b16 %v941, %v939
    %v984 = vpack.c.b16 %v944, %v942
    %v985 = vpack.c.b16 %v945, %v943
    %v986 = vpack.c.b16 %v948, %v946
    %v987 = vpack.c.b16 %v949, %v947
    %v988 = vpack.c.b16 %v952, %v950
    %v989 = vpack.c.b16 %v953, %v951
    %v990 = vpack.c.b16 %v956, %v954
    %v991 = vpack.c.b16 %v957, %v955
    %v992 = vpack.c.b16 %v960, %v958
    %v993 = vpack.c.b16 %v961, %v959
    %1026 = vmatprep.subr.bf16.mxu0 %v977
    %1027 = vmatpush1.bf16.msra.mxu0 %v976
    %1028 = vmatprep.subr.bf16.mxu0 %v975
    %1029 = vmatpush1.bf16.msra.mxu0 %v974
    %1030 = vmatprep.subr.bf16.mxu0 %v973
    %1031 = vmatpush1.bf16.msra.mxu0 %v972
    %1032 = vmatprep.subr.bf16.mxu0 %v971
    %1033 = vmatpush1.bf16.msra.mxu0 %v970
    %1034 = vmatprep.subr.bf16.mxu0 %v969
    %1035 = vmatpush1.bf16.msra.mxu0 %v968
    %1036 = vmatprep.subr.bf16.mxu0 %v967
    %1037 = vmatpush1.bf16.msra.mxu0 %v966
    %1038 = vmatprep.subr.bf16.mxu0 %v965
    %1039 = vmatpush1.bf16.msra.mxu0 %v964
    %1040 = vmatprep.subr.bf16.mxu0 %v963
    %1041 = vmatpush1.bf16.msra.mxu0 %v962
    %1042 = vmatprep.subr.bf16.mxu0 %v993
    %1043 = vmatpush2.bf16.msra.mxu0 %v992
    %1044 = vmatprep.subr.bf16.mxu0 %v991
    %1045 = vmatpush2.bf16.msra.mxu0 %v990
    %1046 = vmatprep.subr.bf16.mxu0 %v989
    %1047 = vmatpush2.bf16.msra.mxu0 %v988
    %1048 = vmatprep.subr.bf16.mxu0 %v987
    %1049 = vmatpush2.bf16.msra.mxu0 %v986
    %1050 = vmatprep.subr.bf16.mxu0 %v985
    %1051 = vmatpush2.bf16.msra.mxu0 %v984
    %1052 = vmatprep.subr.bf16.mxu0 %v983
    %1053 = vmatpush2.bf16.msra.mxu0 %v982
    %1054 = vmatprep.subr.bf16.mxu0 %v981
    %1055 = vmatpush2.bf16.msra.mxu0 %v980
    %1056 = vmatprep.subr.bf16.mxu0 %v979
    %1057 = vmatpush2.bf16.msra.mxu0 %v978
    %1058 = vmatprep.mubr.bf16.mxu0 %v819
    %1059 = vmatmul.mubr.bf16.gmra.mxu0 %v818
    %v1060 = vpop.f32.mrf.mxu0
    %v1061 = vadd.f32 %v859, %v1060
    %v1062 = vpop.f32.mrf.mxu0
    %v1063 = vadd.f32 %v863, %v1062
    %v1064 = vpop.f32.mrf.mxu0
    %v1065 = vpop.f32.mrf.mxu0
    %1066 = vdwg.mxu0
    %v1067 = vand.u32 2147483647, %v1061
    %vm1068 = vcmp.le.f32.partialorder %v1067, 0.7853982
    %vm1069 = vcmp.lt.s32.totalorder %v1061, 0
    %v1070 = vand.u32 %v1061, 2139095040
    %v1071 = vshrl.u32 %v1070, 23
    %v1072 = vsub.s32 %v1071, 127
    %v1073 = vand.u32 2147483647, %v1061
    %v1074 = vand.u32 %v1073, 8388607
    %v1075 = vor.u32 %v1074, 8388608
    %v1076 = vsub.s32 0, %v1075
    %v1077 = vadd.s32 %v1072, 1
    %vm1078 = vcmp.gt.s32.totalorder %v1077, 0
    %v1079 = vsel %vm1078, %v1077, 0
    %v1080 = vshrl.u32 %v1079, 5
    %v1081 = vand.u32 %v1079, 31
    %v1082 = vsub.s32 32, %v1081
    %v1083 = vshrl.u32 683565275, %v1082
    %v1084 = vshll.u32 683565275, %v1081
    %v1085 = vshrl.u32 2475754826, %v1082
    %v1086 = vor.u32 %v1084, %v1085
    %v1087 = vshll.u32 2475754826, %v1081
    %v1088 = vshrl.u32 2131351028, %v1082
    %v1089 = vor.u32 %v1087, %v1088
    %v1090 = vshll.u32 2131351028, %v1081
    %v1091 = vshrl.u32 2102212464, %v1082
    %v1092 = vor.u32 %v1090, %v1091
    %v1093 = vshll.u32 2102212464, %v1081
    %v1094 = vshrl.u32 920167782, %v1082
    %v1095 = vor.u32 %v1093, %v1094
    %v1096 = vshll.u32 920167782, %v1081
    %v1097 = vshrl.u32 1326507024, %v1082
    %v1098 = vor.u32 %v1096, %v1097
    %vm1099 = vcmp.lt.s32.totalorder %v1080, 1
    %vm1100 = vcmp.lt.s32.totalorder %v1080, 2
    %vm1101 = vcmp.lt.s32.totalorder %v1080, 3
    %vm1102 = vcmp.lt.s32.totalorder %v1080, 4
    %v1103 = vsel %vm1099, %v1083, %v1086
    %v1104 = vsel %vm1102, %v1092, 2102212464
    %v1105 = vsel %vm1101, %v1089, %v1104
    %v1106 = vsel %vm1100, %v1103, %v1105
    %v1107 = vsel %vm1099, %v1086, %v1089
    %v1108 = vsel %vm1102, %v1095, 920167782
    %v1109 = vsel %vm1101, %v1092, %v1108
    %v1110 = vsel %vm1100, %v1107, %v1109
    %v1111 = vsel %vm1099, %v1089, %v1092
    %v1112 = vsel %vm1102, %v1098, 1326507024
    %v1113 = vsel %vm1101, %v1095, %v1112
    %v1114 = vsel %vm1100, %v1111, %v1113
    %v1115 = vshll.u32 %v1075, 8
    %v1116 = vmul.u32.u64.compose %v1115, %v1114
    %v1117 = vextract.low.u32 %v1116
    %v1118 = vextract.high.u32 %v1116
    %v1119 = vmul.u32.u64.compose %v1115, %v1110
    %v1120 = vextract.low.u32 %v1119
    %v1121 = vextract.high.u32 %v1119
    %v1122 = vmul.u32 %v1115, %v1106
    %v1123 = vadd.s32 %v1118, %v1120
    %vm1124 = vc.u32 %v1118, %v1120
    %v1125 = vadd.s32 %v1121, 1
    %v1126 = vsel %vm1124, %v1125, %v1121
    %v1127 = vadd.s32 %v1122, %v1126
    %v1128 = vadd.s32 %v1127, 536870912
    %v1129 = vshrl.u32 %v1128, 30
    %v1130 = vshll.u32 %v1129, 30
    %v1131 = vsub.s32 %v1127, %v1130
    %vm1132 = vcmp.lt.s32.totalorder %v1131, 0
    %v1133 = vsub.s32 0, %v1131
    %v1134 = vsel %vm1132, %v1133, %v1131
    %v1135 = vclz %v1134
    %v1136 = vsub.s32 %v1135, 2
    %vm1137 = vcmp.gt.s32.totalorder 0, %v1136
    %v1138 = vsel %vm1137, 0, %v1136
    %v1139 = vsub.s32 32, %v1138
    %v1140 = vshll.u32 %v1131, %v1138
    %v1141 = vshrl.u32 %v1123, %v1139
    %v1142 = vor.u32 %v1140, %v1141
    %v1143 = vsub.s32 4294967266, %v1138
    %v1144 = vadd.s32 %v1143, 127
    %v1145 = vshll.u32 %v1144, 23
    %v1146 = vor.u32 4788187, %v1145
    %v1147 = vand.u32 2147483647, %v1146
    %v1149 = vcvt.s32.f32 %v1142
    %v1150 = vmul.f32 %v1149, %v1147
    %v1151 = vxor.u32 %v1150, 2147483648
    %v1152 = vsel %vm1069, %v1151, %v1150
    %v1153 = vsub.s32 4, %v1129
    %v1154 = vsel %vm1069, %v1153, %v1129
    %v1155 = vsel %vm1068, %v1061, %v1152
    %v1156 = vsel %vm1068, 0, %v1154
    %v1157 = vcosq.f32.pop %v1155
    %v1158 = vsinq.f32.pop %v1155
    %vm1159 = vweird.f32 %v1061
    %v1160 = vadd.s32 %v1156, 3
    %v1161 = vand.u32 %v1160, 3
    %vm1162 = vcmp.lt.s32.totalorder %v1161, 2
    %vm1163 = vcmp.eq.s32.totalorder %v1161, 0
    %v1164 = vxor.u32 %v1158, 2147483648
    %v1165 = vsel %vm1163, %v1157, %v1164
    %vm1166 = vcmp.eq.s32.totalorder %v1161, 2
    %v1167 = vxor.u32 %v1157, 2147483648
    %v1168 = vsel %vm1166, %v1167, %v1158
    %v1169 = vsel %vm1162, %v1165, %v1168
    %v1170 = vsel %vm1159, nan, %v1169
    %v1171 = vand.u32 2147483647, %v1063
    %vm1172 = vcmp.le.f32.partialorder %v1171, 0.7853982
    %vm1173 = vcmp.lt.s32.totalorder %v1063, 0
    %v1174 = vand.u32 %v1063, 2139095040
    %v1175 = vshrl.u32 %v1174, 23
    %v1176 = vsub.s32 %v1175, 127
    %v1177 = vand.u32 2147483647, %v1063
    %v1178 = vand.u32 %v1177, 8388607
    %v1179 = vor.u32 %v1178, 8388608
    %v1180 = vsub.s32 0, %v1179
    %v1181 = vadd.s32 %v1176, 1
    %vm1182 = vcmp.gt.s32.totalorder %v1181, 0
    %v1183 = vsel %vm1182, %v1181, 0
    %v1184 = vshrl.u32 %v1183, 5
    %v1185 = vand.u32 %v1183, 31
    %v1186 = vsub.s32 32, %v1185
    %v1187 = vshrl.u32 683565275, %v1186
    %v1188 = vshll.u32 683565275, %v1185
    %v1189 = vshrl.u32 2475754826, %v1186
    %v1190 = vor.u32 %v1188, %v1189
    %v1191 = vshll.u32 2475754826, %v1185
    %v1192 = vshrl.u32 2131351028, %v1186
    %v1193 = vor.u32 %v1191, %v1192
    %v1194 = vshll.u32 2131351028, %v1185
    %v1195 = vshrl.u32 2102212464, %v1186
    %v1196 = vor.u32 %v1194, %v1195
    %v1197 = vshll.u32 2102212464, %v1185
    %v1198 = vshrl.u32 920167782, %v1186
    %v1199 = vor.u32 %v1197, %v1198
    %v1200 = vshll.u32 920167782, %v1185
    %v1201 = vshrl.u32 1326507024, %v1186
    %v1202 = vor.u32 %v1200, %v1201
    %vm1203 = vcmp.lt.s32.totalorder %v1184, 1
    %vm1204 = vcmp.lt.s32.totalorder %v1184, 2
    %vm1205 = vcmp.lt.s32.totalorder %v1184, 3
    %vm1206 = vcmp.lt.s32.totalorder %v1184, 4
    %v1207 = vsel %vm1203, %v1187, %v1190
    %v1208 = vsel %vm1206, %v1196, 2102212464
    %v1209 = vsel %vm1205, %v1193, %v1208
    %v1210 = vsel %vm1204, %v1207, %v1209
    %v1211 = vsel %vm1203, %v1190, %v1193
    %v1212 = vsel %vm1206, %v1199, 920167782
    %v1213 = vsel %vm1205, %v1196, %v1212
    %v1214 = vsel %vm1204, %v1211, %v1213
    %v1215 = vsel %vm1203, %v1193, %v1196
    %v1216 = vsel %vm1206, %v1202, 1326507024
    %v1217 = vsel %vm1205, %v1199, %v1216
    %v1218 = vsel %vm1204, %v1215, %v1217
    %v1219 = vshll.u32 %v1179, 8
    %v1220 = vmul.u32.u64.compose %v1219, %v1218
    %v1221 = vextract.low.u32 %v1220
    %v1222 = vextract.high.u32 %v1220
    %v1223 = vmul.u32.u64.compose %v1219, %v1214
    %v1224 = vextract.low.u32 %v1223
    %v1225 = vextract.high.u32 %v1223
    %v1226 = vmul.u32 %v1219, %v1210
    %v1227 = vadd.s32 %v1222, %v1224
    %vm1228 = vc.u32 %v1222, %v1224
    %v1229 = vadd.s32 %v1225, 1
    %v1230 = vsel %vm1228, %v1229, %v1225
    %v1231 = vadd.s32 %v1226, %v1230
    %v1232 = vadd.s32 %v1231, 536870912
    %v1233 = vshrl.u32 %v1232, 30
    %v1234 = vshll.u32 %v1233, 30
    %v1235 = vsub.s32 %v1231, %v1234
    %vm1236 = vcmp.lt.s32.totalorder %v1235, 0
    %v1237 = vsub.s32 0, %v1235
    %v1238 = vsel %vm1236, %v1237, %v1235
    %v1239 = vclz %v1238
    %v1240 = vsub.s32 %v1239, 2
    %vm1241 = vcmp.gt.s32.totalorder 0, %v1240
    %v1242 = vsel %vm1241, 0, %v1240
    %v1243 = vsub.s32 32, %v1242
    %v1244 = vshll.u32 %v1235, %v1242
    %v1245 = vshrl.u32 %v1227, %v1243
    %v1246 = vor.u32 %v1244, %v1245
    %v1247 = vsub.s32 4294967266, %v1242
    %v1248 = vadd.s32 %v1247, 127
    %v1249 = vshll.u32 %v1248, 23
    %v1250 = vor.u32 4788187, %v1249
    %v1251 = vand.u32 2147483647, %v1250
    %v1253 = vcvt.s32.f32 %v1246
    %v1254 = vmul.f32 %v1253, %v1251
    %v1255 = vxor.u32 %v1254, 2147483648
    %v1256 = vsel %vm1173, %v1255, %v1254
    %v1257 = vsub.s32 4, %v1233
    %v1258 = vsel %vm1173, %v1257, %v1233
    %v1259 = vsel %vm1172, %v1063, %v1256
    %v1260 = vsel %vm1172, 0, %v1258
    %v1261 = vcosq.f32.pop %v1259
    %v1262 = vsinq.f32.pop %v1259
    %vm1263 = vweird.f32 %v1063
    %v1264 = vadd.s32 %v1260, 3
    %v1265 = vand.u32 %v1264, 3
    %vm1266 = vcmp.lt.s32.totalorder %v1265, 2
    %vm1267 = vcmp.eq.s32.totalorder %v1265, 0
    %v1268 = vxor.u32 %v1262, 2147483648
    %v1269 = vsel %vm1267, %v1261, %v1268
    %vm1270 = vcmp.eq.s32.totalorder %v1265, 2
    %v1271 = vxor.u32 %v1261, 2147483648
    %v1272 = vsel %vm1270, %v1271, %v1262
    %v1273 = vsel %vm1266, %v1269, %v1272
    %v1274 = vsel %vm1263, nan, %v1273
    %v1275 = vpack.c.bf16 %v1170, %v1170
    %v1276 = vpack.c.bf16 %v1274, %v1274
    %s1277 = scalar_lea.vmem [#allocation4], 512
    %v1278 = vld [vmem:[%s1277] sm:$0xff]
    %v1279 = vld [vmem:[%s1277 + $0x8] sm:$0xff]
    %v1280 = vld [vmem:[%s1277 + $0x10] sm:$0xff]
    %v1281 = vld [vmem:[%s1277 + $0x18] sm:$0xff]
    %v1282 = vld [vmem:[%s1277 + $0x20] sm:$0xff]
    %v1283 = vld [vmem:[%s1277 + $0x28] sm:$0xff]
    %v1284 = vld [vmem:[%s1277 + $0x30] sm:$0xff]
    %v1285 = vld [vmem:[%s1277 + $0x38] sm:$0xff]
    %v1286 = vld [vmem:[%s1277 + $0x40] sm:$0xff]
    %v1287 = vld [vmem:[%s1277 + $0x48] sm:$0xff]
    %v1288 = vld [vmem:[%s1277 + $0x50] sm:$0xff]
    %v1289 = vld [vmem:[%s1277 + $0x58] sm:$0xff]
    %v1290 = vld [vmem:[%s1277 + $0x60] sm:$0xff]
    %v1291 = vld [vmem:[%s1277 + $0x68] sm:$0xff]
    %v1292 = vld [vmem:[%s1277 + $0x70] sm:$0xff]
    %v1293 = vld [vmem:[%s1277 + $0x78] sm:$0xff]
    %v1294 = vld [vmem:[%s1277 + $0x80] sm:$0xff]
    %v1295 = vld [vmem:[%s1277 + $0x88] sm:$0xff]
    %v1296 = vld [vmem:[%s1277 + $0x90] sm:$0xff]
    %v1297 = vld [vmem:[%s1277 + $0x98] sm:$0xff]
    %v1298 = vld [vmem:[%s1277 + $0xa0] sm:$0xff]
    %v1299 = vld [vmem:[%s1277 + $0xa8] sm:$0xff]
    %v1300 = vld [vmem:[%s1277 + $0xb0] sm:$0xff]
    %v1301 = vld [vmem:[%s1277 + $0xb8] sm:$0xff]
    %v1302 = vld [vmem:[%s1277 + $0xc0] sm:$0xff]
    %v1303 = vld [vmem:[%s1277 + $0xc8] sm:$0xff]
    %v1304 = vld [vmem:[%s1277 + $0xd0] sm:$0xff]
    %v1305 = vld [vmem:[%s1277 + $0xd8] sm:$0xff]
    %v1306 = vld [vmem:[%s1277 + $0xe0] sm:$0xff]
    %v1307 = vld [vmem:[%s1277 + $0xe8] sm:$0xff]
    %v1308 = vld [vmem:[%s1277 + $0xf0] sm:$0xff]
    %v1309 = vld [vmem:[%s1277 + $0xf8] sm:$0xff]
    %s1310 = scalar_lea.vmem %s4, 4
    %v1311 = vld [vmem:[%s1310] sm:$0x3]
    %v1313 = vlaneseq
    %v1314 = vshrl.u32 %v1313, 7
    %v1315 = vsub.s32 0, %v1314
    %v1316 = vrot.slane %v1311, %v1315
    %v1317 = vlaneseq
    %v1318 = vshrl.u32 %v1317, 7
    %v1319 = vsub.s32 1, %v1318
    %v1320 = vrot.slane %v1311, %v1319
    %v1355 = vunpack.c.l.b16 %v1278
    %v1356 = vunpack.c.h.b16 %v1278
    %v1357 = vunpack.c.l.b16 %v1279
    %v1358 = vunpack.c.h.b16 %v1279
    %v1359 = vunpack.c.l.b16 %v1280
    %v1360 = vunpack.c.h.b16 %v1280
    %v1361 = vunpack.c.l.b16 %v1281
    %v1362 = vunpack.c.h.b16 %v1281
    %v1363 = vunpack.c.l.b16 %v1282
    %v1364 = vunpack.c.h.b16 %v1282
    %v1365 = vunpack.c.l.b16 %v1283
    %v1366 = vunpack.c.h.b16 %v1283
    %v1367 = vunpack.c.l.b16 %v1284
    %v1368 = vunpack.c.h.b16 %v1284
    %v1369 = vunpack.c.l.b16 %v1285
    %v1370 = vunpack.c.h.b16 %v1285
    %v1371 = vunpack.c.l.b16 %v1286
    %v1372 = vunpack.c.h.b16 %v1286
    %v1373 = vunpack.c.l.b16 %v1287
    %v1374 = vunpack.c.h.b16 %v1287
    %v1375 = vunpack.c.l.b16 %v1288
    %v1376 = vunpack.c.h.b16 %v1288
    %v1377 = vunpack.c.l.b16 %v1289
    %v1378 = vunpack.c.h.b16 %v1289
    %v1379 = vunpack.c.l.b16 %v1290
    %v1380 = vunpack.c.h.b16 %v1290
    %v1381 = vunpack.c.l.b16 %v1291
    %v1382 = vunpack.c.h.b16 %v1291
    %v1383 = vunpack.c.l.b16 %v1292
    %v1384 = vunpack.c.h.b16 %v1292
    %v1385 = vunpack.c.l.b16 %v1293
    %v1386 = vunpack.c.h.b16 %v1293
    %v1387 = vunpack.c.l.b16 %v1294
    %v1388 = vunpack.c.h.b16 %v1294
    %v1389 = vunpack.c.l.b16 %v1295
    %v1390 = vunpack.c.h.b16 %v1295
    %v1391 = vunpack.c.l.b16 %v1296
    %v1392 = vunpack.c.h.b16 %v1296
    %v1393 = vunpack.c.l.b16 %v1297
    %v1394 = vunpack.c.h.b16 %v1297
    %v1395 = vunpack.c.l.b16 %v1298
    %v1396 = vunpack.c.h.b16 %v1298
    %v1397 = vunpack.c.l.b16 %v1299
    %v1398 = vunpack.c.h.b16 %v1299
    %v1399 = vunpack.c.l.b16 %v1300
    %v1400 = vunpack.c.h.b16 %v1300
    %v1401 = vunpack.c.l.b16 %v1301
    %v1402 = vunpack.c.h.b16 %v1301
    %v1403 = vunpack.c.l.b16 %v1302
    %v1404 = vunpack.c.h.b16 %v1302
    %v1405 = vunpack.c.l.b16 %v1303
    %v1406 = vunpack.c.h.b16 %v1303
    %v1407 = vunpack.c.l.b16 %v1304
    %v1408 = vunpack.c.h.b16 %v1304
    %v1409 = vunpack.c.l.b16 %v1305
    %v1410 = vunpack.c.h.b16 %v1305
    %v1411 = vunpack.c.l.b16 %v1306
    %v1412 = vunpack.c.h.b16 %v1306
    %v1413 = vunpack.c.l.b16 %v1307
    %v1414 = vunpack.c.h.b16 %v1307
    %v1415 = vunpack.c.l.b16 %v1308
    %v1416 = vunpack.c.h.b16 %v1308
    %v1417 = vunpack.c.l.b16 %v1309
    %v1418 = vunpack.c.h.b16 %v1309
    %v1419 = vpack.c.b16 %v1357, %v1355
    %v1420 = vpack.c.b16 %v1358, %v1356
    %v1421 = vpack.c.b16 %v1361, %v1359
    %v1422 = vpack.c.b16 %v1362, %v1360
    %v1423 = vpack.c.b16 %v1365, %v1363
    %v1424 = vpack.c.b16 %v1366, %v1364
    %v1425 = vpack.c.b16 %v1369, %v1367
    %v1426 = vpack.c.b16 %v1370, %v1368
    %v1427 = vpack.c.b16 %v1373, %v1371
    %v1428 = vpack.c.b16 %v1374, %v1372
    %v1429 = vpack.c.b16 %v1377, %v1375
    %v1430 = vpack.c.b16 %v1378, %v1376
    %v1431 = vpack.c.b16 %v1381, %v1379
    %v1432 = vpack.c.b16 %v1382, %v1380
    %v1433 = vpack.c.b16 %v1385, %v1383
    %v1434 = vpack.c.b16 %v1386, %v1384
    %v1435 = vpack.c.b16 %v1389, %v1387
    %v1436 = vpack.c.b16 %v1390, %v1388
    %v1437 = vpack.c.b16 %v1393, %v1391
    %v1438 = vpack.c.b16 %v1394, %v1392
    %v1439 = vpack.c.b16 %v1397, %v1395
    %v1440 = vpack.c.b16 %v1398, %v1396
    %v1441 = vpack.c.b16 %v1401, %v1399
    %v1442 = vpack.c.b16 %v1402, %v1400
    %v1443 = vpack.c.b16 %v1405, %v1403
    %v1444 = vpack.c.b16 %v1406, %v1404
    %v1445 = vpack.c.b16 %v1409, %v1407
    %v1446 = vpack.c.b16 %v1410, %v1408
    %v1447 = vpack.c.b16 %v1413, %v1411
    %v1448 = vpack.c.b16 %v1414, %v1412
    %v1449 = vpack.c.b16 %v1417, %v1415
    %v1450 = vpack.c.b16 %v1418, %v1416
    %1483 = vmatprep.subr.bf16.mxu0 %v1434
    %1484 = vmatpush1.bf16.msra.mxu0 %v1433
    %1485 = vmatprep.subr.bf16.mxu0 %v1432
    %1486 = vmatpush1.bf16.msra.mxu0 %v1431
    %1487 = vmatprep.subr.bf16.mxu0 %v1430
    %1488 = vmatpush1.bf16.msra.mxu0 %v1429
    %1489 = vmatprep.subr.bf16.mxu0 %v1428
    %1490 = vmatpush1.bf16.msra.mxu0 %v1427
    %1491 = vmatprep.subr.bf16.mxu0 %v1426
    %1492 = vmatpush1.bf16.msra.mxu0 %v1425
    %1493 = vmatprep.subr.bf16.mxu0 %v1424
    %1494 = vmatpush1.bf16.msra.mxu0 %v1423
    %1495 = vmatprep.subr.bf16.mxu0 %v1422
    %1496 = vmatpush1.bf16.msra.mxu0 %v1421
    %1497 = vmatprep.subr.bf16.mxu0 %v1420
    %1498 = vmatpush1.bf16.msra.mxu0 %v1419
    %1499 = vmatprep.subr.bf16.mxu0 %v1450
    %1500 = vmatpush2.bf16.msra.mxu0 %v1449
    %1501 = vmatprep.subr.bf16.mxu0 %v1448
    %1502 = vmatpush2.bf16.msra.mxu0 %v1447
    %1503 = vmatprep.subr.bf16.mxu0 %v1446
    %1504 = vmatpush2.bf16.msra.mxu0 %v1445
    %1505 = vmatprep.subr.bf16.mxu0 %v1444
    %1506 = vmatpush2.bf16.msra.mxu0 %v1443
    %1507 = vmatprep.subr.bf16.mxu0 %v1442
    %1508 = vmatpush2.bf16.msra.mxu0 %v1441
    %1509 = vmatprep.subr.bf16.mxu0 %v1440
    %1510 = vmatpush2.bf16.msra.mxu0 %v1439
    %1511 = vmatprep.subr.bf16.mxu0 %v1438
    %1512 = vmatpush2.bf16.msra.mxu0 %v1437
    %1513 = vmatprep.subr.bf16.mxu0 %v1436
    %1514 = vmatpush2.bf16.msra.mxu0 %v1435
    %1515 = vmatprep.mubr.bf16.mxu0 %v1276
    %1516 = vmatmul.mubr.bf16.gmra.mxu0 %v1275
    %v1517 = vpop.f32.mrf.mxu0
    %v1518 = vadd.f32 %v1316, %v1517
    %v1519 = vpop.f32.mrf.mxu0
    %v1520 = vadd.f32 %v1320, %v1519
    %v1521 = vpop.f32.mrf.mxu0
    %v1522 = vpop.f32.mrf.mxu0
    %1523 = vdwg.mxu0
    %v1524 = vand.u32 2147483647, %v1518
    %vm1525 = vcmp.le.f32.partialorder %v1524, 0.7853982
    %vm1526 = vcmp.lt.s32.totalorder %v1518, 0
    %v1527 = vand.u32 %v1518, 2139095040
    %v1528 = vshrl.u32 %v1527, 23
    %v1529 = vsub.s32 %v1528, 127
    %v1530 = vand.u32 2147483647, %v1518
    %v1531 = vand.u32 %v1530, 8388607
    %v1532 = vor.u32 %v1531, 8388608
    %v1533 = vsub.s32 0, %v1532
    %v1534 = vadd.s32 %v1529, 1
    %vm1535 = vcmp.gt.s32.totalorder %v1534, 0
    %v1536 = vsel %vm1535, %v1534, 0
    %v1537 = vshrl.u32 %v1536, 5
    %v1538 = vand.u32 %v1536, 31
    %v1539 = vsub.s32 32, %v1538
    %v1540 = vshrl.u32 683565275, %v1539
    %v1541 = vshll.u32 683565275, %v1538
    %v1542 = vshrl.u32 2475754826, %v1539
    %v1543 = vor.u32 %v1541, %v1542
    %v1544 = vshll.u32 2475754826, %v1538
    %v1545 = vshrl.u32 2131351028, %v1539
    %v1546 = vor.u32 %v1544, %v1545
    %v1547 = vshll.u32 2131351028, %v1538
    %v1548 = vshrl.u32 2102212464, %v1539
    %v1549 = vor.u32 %v1547, %v1548
    %v1550 = vshll.u32 2102212464, %v1538
    %v1551 = vshrl.u32 920167782, %v1539
    %v1552 = vor.u32 %v1550, %v1551
    %v1553 = vshll.u32 920167782, %v1538
    %v1554 = vshrl.u32 1326507024, %v1539
    %v1555 = vor.u32 %v1553, %v1554
    %vm1556 = vcmp.lt.s32.totalorder %v1537, 1
    %vm1557 = vcmp.lt.s32.totalorder %v1537, 2
    %vm1558 = vcmp.lt.s32.totalorder %v1537, 3
    %vm1559 = vcmp.lt.s32.totalorder %v1537, 4
    %v1560 = vsel %vm1556, %v1540, %v1543
    %v1561 = vsel %vm1559, %v1549, 2102212464
    %v1562 = vsel %vm1558, %v1546, %v1561
    %v1563 = vsel %vm1557, %v1560, %v1562
    %v1564 = vsel %vm1556, %v1543, %v1546
    %v1565 = vsel %vm1559, %v1552, 920167782
    %v1566 = vsel %vm1558, %v1549, %v1565
    %v1567 = vsel %vm1557, %v1564, %v1566
    %v1568 = vsel %vm1556, %v1546, %v1549
    %v1569 = vsel %vm1559, %v1555, 1326507024
    %v1570 = vsel %vm1558, %v1552, %v1569
    %v1571 = vsel %vm1557, %v1568, %v1570
    %v1572 = vshll.u32 %v1532, 8
    %v1573 = vmul.u32.u64.compose %v1572, %v1571
    %v1574 = vextract.low.u32 %v1573
    %v1575 = vextract.high.u32 %v1573
    %v1576 = vmul.u32.u64.compose %v1572, %v1567
    %v1577 = vextract.low.u32 %v1576
    %v1578 = vextract.high.u32 %v1576
    %v1579 = vmul.u32 %v1572, %v1563
    %v1580 = vadd.s32 %v1575, %v1577
    %vm1581 = vc.u32 %v1575, %v1577
    %v1582 = vadd.s32 %v1578, 1
    %v1583 = vsel %vm1581, %v1582, %v1578
    %v1584 = vadd.s32 %v1579, %v1583
    %v1585 = vadd.s32 %v1584, 536870912
    %v1586 = vshrl.u32 %v1585, 30
    %v1587 = vshll.u32 %v1586, 30
    %v1588 = vsub.s32 %v1584, %v1587
    %vm1589 = vcmp.lt.s32.totalorder %v1588, 0
    %v1590 = vsub.s32 0, %v1588
    %v1591 = vsel %vm1589, %v1590, %v1588
    %v1592 = vclz %v1591
    %v1593 = vsub.s32 %v1592, 2
    %vm1594 = vcmp.gt.s32.totalorder 0, %v1593
    %v1595 = vsel %vm1594, 0, %v1593
    %v1596 = vsub.s32 32, %v1595
    %v1597 = vshll.u32 %v1588, %v1595
    %v1598 = vshrl.u32 %v1580, %v1596
    %v1599 = vor.u32 %v1597, %v1598
    %v1600 = vsub.s32 4294967266, %v1595
    %v1601 = vadd.s32 %v1600, 127
    %v1602 = vshll.u32 %v1601, 23
    %v1603 = vor.u32 4788187, %v1602
    %v1604 = vand.u32 2147483647, %v1603
    %v1606 = vcvt.s32.f32 %v1599
    %v1607 = vmul.f32 %v1606, %v1604
    %v1608 = vxor.u32 %v1607, 2147483648
    %v1609 = vsel %vm1526, %v1608, %v1607
    %v1610 = vsub.s32 4, %v1586
    %v1611 = vsel %vm1526, %v1610, %v1586
    %v1612 = vsel %vm1525, %v1518, %v1609
    %v1613 = vsel %vm1525, 0, %v1611
    %v1614 = vcosq.f32.pop %v1612
    %v1615 = vsinq.f32.pop %v1612
    %vm1616 = vweird.f32 %v1518
    %v1617 = vadd.s32 %v1613, 3
    %v1618 = vand.u32 %v1617, 3
    %vm1619 = vcmp.lt.s32.totalorder %v1618, 2
    %vm1620 = vcmp.eq.s32.totalorder %v1618, 0
    %v1621 = vxor.u32 %v1615, 2147483648
    %v1622 = vsel %vm1620, %v1614, %v1621
    %vm1623 = vcmp.eq.s32.totalorder %v1618, 2
    %v1624 = vxor.u32 %v1614, 2147483648
    %v1625 = vsel %vm1623, %v1624, %v1615
    %v1626 = vsel %vm1619, %v1622, %v1625
    %v1627 = vsel %vm1616, nan, %v1626
    %v1628 = vand.u32 2147483647, %v1520
    %vm1629 = vcmp.le.f32.partialorder %v1628, 0.7853982
    %vm1630 = vcmp.lt.s32.totalorder %v1520, 0
    %v1631 = vand.u32 %v1520, 2139095040
    %v1632 = vshrl.u32 %v1631, 23
    %v1633 = vsub.s32 %v1632, 127
    %v1634 = vand.u32 2147483647, %v1520
    %v1635 = vand.u32 %v1634, 8388607
    %v1636 = vor.u32 %v1635, 8388608
    %v1637 = vsub.s32 0, %v1636
    %v1638 = vadd.s32 %v1633, 1
    %vm1639 = vcmp.gt.s32.totalorder %v1638, 0
    %v1640 = vsel %vm1639, %v1638, 0
    %v1641 = vshrl.u32 %v1640, 5
    %v1642 = vand.u32 %v1640, 31
    %v1643 = vsub.s32 32, %v1642
    %v1644 = vshrl.u32 683565275, %v1643
    %v1645 = vshll.u32 683565275, %v1642
    %v1646 = vshrl.u32 2475754826, %v1643
    %v1647 = vor.u32 %v1645, %v1646
    %v1648 = vshll.u32 2475754826, %v1642
    %v1649 = vshrl.u32 2131351028, %v1643
    %v1650 = vor.u32 %v1648, %v1649
    %v1651 = vshll.u32 2131351028, %v1642
    %v1652 = vshrl.u32 2102212464, %v1643
    %v1653 = vor.u32 %v1651, %v1652
    %v1654 = vshll.u32 2102212464, %v1642
    %v1655 = vshrl.u32 920167782, %v1643
    %v1656 = vor.u32 %v1654, %v1655
    %v1657 = vshll.u32 920167782, %v1642
    %v1658 = vshrl.u32 1326507024, %v1643
    %v1659 = vor.u32 %v1657, %v1658
    %vm1660 = vcmp.lt.s32.totalorder %v1641, 1
    %vm1661 = vcmp.lt.s32.totalorder %v1641, 2
    %vm1662 = vcmp.lt.s32.totalorder %v1641, 3
    %vm1663 = vcmp.lt.s32.totalorder %v1641, 4
    %v1664 = vsel %vm1660, %v1644, %v1647
    %v1665 = vsel %vm1663, %v1653, 2102212464
    %v1666 = vsel %vm1662, %v1650, %v1665
    %v1667 = vsel %vm1661, %v1664, %v1666
    %v1668 = vsel %vm1660, %v1647, %v1650
    %v1669 = vsel %vm1663, %v1656, 920167782
    %v1670 = vsel %vm1662, %v1653, %v1669
    %v1671 = vsel %vm1661, %v1668, %v1670
    %v1672 = vsel %vm1660, %v1650, %v1653
    %v1673 = vsel %vm1663, %v1659, 1326507024
    %v1674 = vsel %vm1662, %v1656, %v1673
    %v1675 = vsel %vm1661, %v1672, %v1674
    %v1676 = vshll.u32 %v1636, 8
    %v1677 = vmul.u32.u64.compose %v1676, %v1675
    %v1678 = vextract.low.u32 %v1677
    %v1679 = vextract.high.u32 %v1677
    %v1680 = vmul.u32.u64.compose %v1676, %v1671
    %v1681 = vextract.low.u32 %v1680
    %v1682 = vextract.high.u32 %v1680
    %v1683 = vmul.u32 %v1676, %v1667
    %v1684 = vadd.s32 %v1679, %v1681
    %vm1685 = vc.u32 %v1679, %v1681
    %v1686 = vadd.s32 %v1682, 1
    %v1687 = vsel %vm1685, %v1686, %v1682
    %v1688 = vadd.s32 %v1683, %v1687
    %v1689 = vadd.s32 %v1688, 536870912
    %v1690 = vshrl.u32 %v1689, 30
    %v1691 = vshll.u32 %v1690, 30
    %v1692 = vsub.s32 %v1688, %v1691
    %vm1693 = vcmp.lt.s32.totalorder %v1692, 0
    %v1694 = vsub.s32 0, %v1692
    %v1695 = vsel %vm1693, %v1694, %v1692
    %v1696 = vclz %v1695
    %v1697 = vsub.s32 %v1696, 2
    %vm1698 = vcmp.gt.s32.totalorder 0, %v1697
    %v1699 = vsel %vm1698, 0, %v1697
    %v1700 = vsub.s32 32, %v1699
    %v1701 = vshll.u32 %v1692, %v1699
    %v1702 = vshrl.u32 %v1684, %v1700
    %v1703 = vor.u32 %v1701, %v1702
    %v1704 = vsub.s32 4294967266, %v1699
    %v1705 = vadd.s32 %v1704, 127
    %v1706 = vshll.u32 %v1705, 23
    %v1707 = vor.u32 4788187, %v1706
    %v1708 = vand.u32 2147483647, %v1707
    %v1710 = vcvt.s32.f32 %v1703
    %v1711 = vmul.f32 %v1710, %v1708
    %v1712 = vxor.u32 %v1711, 2147483648
    %v1713 = vsel %vm1630, %v1712, %v1711
    %v1714 = vsub.s32 4, %v1690
    %v1715 = vsel %vm1630, %v1714, %v1690
    %v1716 = vsel %vm1629, %v1520, %v1713
    %v1717 = vsel %vm1629, 0, %v1715
    %v1718 = vcosq.f32.pop %v1716
    %v1719 = vsinq.f32.pop %v1716
    %vm1720 = vweird.f32 %v1520
    %v1721 = vadd.s32 %v1717, 3
    %v1722 = vand.u32 %v1721, 3
    %vm1723 = vcmp.lt.s32.totalorder %v1722, 2
    %vm1724 = vcmp.eq.s32.totalorder %v1722, 0
    %v1725 = vxor.u32 %v1719, 2147483648
    %v1726 = vsel %vm1724, %v1718, %v1725
    %vm1727 = vcmp.eq.s32.totalorder %v1722, 2
    %v1728 = vxor.u32 %v1718, 2147483648
    %v1729 = vsel %vm1727, %v1728, %v1719
    %v1730 = vsel %vm1723, %v1726, %v1729
    %v1731 = vsel %vm1720, nan, %v1730
    %v1732 = vpack.c.bf16 %v1627, %v1627
    %v1733 = vpack.c.bf16 %v1731, %v1731
    %s1734 = scalar_lea.vmem [#allocation4], 768
    %v1735 = vld [vmem:[%s1734] sm:$0xff]
    %v1736 = vld [vmem:[%s1734 + $0x8] sm:$0xff]
    %v1737 = vld [vmem:[%s1734 + $0x10] sm:$0xff]
    %v1738 = vld [vmem:[%s1734 + $0x18] sm:$0xff]
    %v1739 = vld [vmem:[%s1734 + $0x20] sm:$0xff]
    %v1740 = vld [vmem:[%s1734 + $0x28] sm:$0xff]
    %v1741 = vld [vmem:[%s1734 + $0x30] sm:$0xff]
    %v1742 = vld [vmem:[%s1734 + $0x38] sm:$0xff]
    %v1743 = vld [vmem:[%s1734 + $0x40] sm:$0xff]
    %v1744 = vld [vmem:[%s1734 + $0x48] sm:$0xff]
    %v1745 = vld [vmem:[%s1734 + $0x50] sm:$0xff]
    %v1746 = vld [vmem:[%s1734 + $0x58] sm:$0xff]
    %v1747 = vld [vmem:[%s1734 + $0x60] sm:$0xff]
    %v1748 = vld [vmem:[%s1734 + $0x68] sm:$0xff]
    %v1749 = vld [vmem:[%s1734 + $0x70] sm:$0xff]
    %v1750 = vld [vmem:[%s1734 + $0x78] sm:$0xff]
    %v1751 = vld [vmem:[%s1734 + $0x80] sm:$0xff]
    %v1752 = vld [vmem:[%s1734 + $0x88] sm:$0xff]
    %v1753 = vld [vmem:[%s1734 + $0x90] sm:$0xff]
    %v1754 = vld [vmem:[%s1734 + $0x98] sm:$0xff]
    %v1755 = vld [vmem:[%s1734 + $0xa0] sm:$0xff]
    %v1756 = vld [vmem:[%s1734 + $0xa8] sm:$0xff]
    %v1757 = vld [vmem:[%s1734 + $0xb0] sm:$0xff]
    %v1758 = vld [vmem:[%s1734 + $0xb8] sm:$0xff]
    %v1759 = vld [vmem:[%s1734 + $0xc0] sm:$0xff]
    %v1760 = vld [vmem:[%s1734 + $0xc8] sm:$0xff]
    %v1761 = vld [vmem:[%s1734 + $0xd0] sm:$0xff]
    %v1762 = vld [vmem:[%s1734 + $0xd8] sm:$0xff]
    %v1763 = vld [vmem:[%s1734 + $0xe0] sm:$0xff]
    %v1764 = vld [vmem:[%s1734 + $0xe8] sm:$0xff]
    %v1765 = vld [vmem:[%s1734 + $0xf0] sm:$0xff]
    %v1766 = vld [vmem:[%s1734 + $0xf8] sm:$0xff]
    %s1767 = scalar_lea.vmem %s4, 6
    %v1768 = vld [vmem:[%s1767] sm:$0x3]
    %v1770 = vlaneseq
    %v1771 = vshrl.u32 %v1770, 7
    %v1772 = vsub.s32 0, %v1771
    %v1773 = vrot.slane %v1768, %v1772
    %v1774 = vlaneseq
    %v1775 = vshrl.u32 %v1774, 7
    %v1776 = vsub.s32 1, %v1775
    %v1777 = vrot.slane %v1768, %v1776
    %v1812 = vunpack.c.l.b16 %v1735
    %v1813 = vunpack.c.h.b16 %v1735
    %v1814 = vunpack.c.l.b16 %v1736
    %v1815 = vunpack.c.h.b16 %v1736
    %v1816 = vunpack.c.l.b16 %v1737
    %v1817 = vunpack.c.h.b16 %v1737
    %v1818 = vunpack.c.l.b16 %v1738
    %v1819 = vunpack.c.h.b16 %v1738
    %v1820 = vunpack.c.l.b16 %v1739
    %v1821 = vunpack.c.h.b16 %v1739
    %v1822 = vunpack.c.l.b16 %v1740
    %v1823 = vunpack.c.h.b16 %v1740
    %v1824 = vunpack.c.l.b16 %v1741
    %v1825 = vunpack.c.h.b16 %v1741
    %v1826 = vunpack.c.l.b16 %v1742
    %v1827 = vunpack.c.h.b16 %v1742
    %v1828 = vunpack.c.l.b16 %v1743
    %v1829 = vunpack.c.h.b16 %v1743
    %v1830 = vunpack.c.l.b16 %v1744
    %v1831 = vunpack.c.h.b16 %v1744
    %v1832 = vunpack.c.l.b16 %v1745
    %v1833 = vunpack.c.h.b16 %v1745
    %v1834 = vunpack.c.l.b16 %v1746
    %v1835 = vunpack.c.h.b16 %v1746
    %v1836 = vunpack.c.l.b16 %v1747
    %v1837 = vunpack.c.h.b16 %v1747
    %v1838 = vunpack.c.l.b16 %v1748
    %v1839 = vunpack.c.h.b16 %v1748
    %v1840 = vunpack.c.l.b16 %v1749
    %v1841 = vunpack.c.h.b16 %v1749
    %v1842 = vunpack.c.l.b16 %v1750
    %v1843 = vunpack.c.h.b16 %v1750
    %v1844 = vunpack.c.l.b16 %v1751
    %v1845 = vunpack.c.h.b16 %v1751
    %v1846 = vunpack.c.l.b16 %v1752
    %v1847 = vunpack.c.h.b16 %v1752
    %v1848 = vunpack.c.l.b16 %v1753
    %v1849 = vunpack.c.h.b16 %v1753
    %v1850 = vunpack.c.l.b16 %v1754
    %v1851 = vunpack.c.h.b16 %v1754
    %v1852 = vunpack.c.l.b16 %v1755
    %v1853 = vunpack.c.h.b16 %v1755
    %v1854 = vunpack.c.l.b16 %v1756
    %v1855 = vunpack.c.h.b16 %v1756
    %v1856 = vunpack.c.l.b16 %v1757
    %v1857 = vunpack.c.h.b16 %v1757
    %v1858 = vunpack.c.l.b16 %v1758
    %v1859 = vunpack.c.h.b16 %v1758
    %v1860 = vunpack.c.l.b16 %v1759
    %v1861 = vunpack.c.h.b16 %v1759
    %v1862 = vunpack.c.l.b16 %v1760
    %v1863 = vunpack.c.h.b16 %v1760
    %v1864 = vunpack.c.l.b16 %v1761
    %v1865 = vunpack.c.h.b16 %v1761
    %v1866 = vunpack.c.l.b16 %v1762
    %v1867 = vunpack.c.h.b16 %v1762
    %v1868 = vunpack.c.l.b16 %v1763
    %v1869 = vunpack.c.h.b16 %v1763
    %v1870 = vunpack.c.l.b16 %v1764
    %v1871 = vunpack.c.h.b16 %v1764
    %v1872 = vunpack.c.l.b16 %v1765
    %v1873 = vunpack.c.h.b16 %v1765
    %v1874 = vunpack.c.l.b16 %v1766
    %v1875 = vunpack.c.h.b16 %v1766
    %v1876 = vpack.c.b16 %v1814, %v1812
    %v1877 = vpack.c.b16 %v1815, %v1813
    %v1878 = vpack.c.b16 %v1818, %v1816
    %v1879 = vpack.c.b16 %v1819, %v1817
    %v1880 = vpack.c.b16 %v1822, %v1820
    %v1881 = vpack.c.b16 %v1823, %v1821
    %v1882 = vpack.c.b16 %v1826, %v1824
    %v1883 = vpack.c.b16 %v1827, %v1825
    %v1884 = vpack.c.b16 %v1830, %v1828
    %v1885 = vpack.c.b16 %v1831, %v1829
    %v1886 = vpack.c.b16 %v1834, %v1832
    %v1887 = vpack.c.b16 %v1835, %v1833
    %v1888 = vpack.c.b16 %v1838, %v1836
    %v1889 = vpack.c.b16 %v1839, %v1837
    %v1890 = vpack.c.b16 %v1842, %v1840
    %v1891 = vpack.c.b16 %v1843, %v1841
    %v1892 = vpack.c.b16 %v1846, %v1844
    %v1893 = vpack.c.b16 %v1847, %v1845
    %v1894 = vpack.c.b16 %v1850, %v1848
    %v1895 = vpack.c.b16 %v1851, %v1849
    %v1896 = vpack.c.b16 %v1854, %v1852
    %v1897 = vpack.c.b16 %v1855, %v1853
    %v1898 = vpack.c.b16 %v1858, %v1856
    %v1899 = vpack.c.b16 %v1859, %v1857
    %v1900 = vpack.c.b16 %v1862, %v1860
    %v1901 = vpack.c.b16 %v1863, %v1861
    %v1902 = vpack.c.b16 %v1866, %v1864
    %v1903 = vpack.c.b16 %v1867, %v1865
    %v1904 = vpack.c.b16 %v1870, %v1868
    %v1905 = vpack.c.b16 %v1871, %v1869
    %v1906 = vpack.c.b16 %v1874, %v1872
    %v1907 = vpack.c.b16 %v1875, %v1873
    %1940 = vmatprep.subr.bf16.mxu0 %v1891
    %1941 = vmatpush1.bf16.msra.mxu0 %v1890
    %1942 = vmatprep.subr.bf16.mxu0 %v1889
    %1943 = vmatpush1.bf16.msra.mxu0 %v1888
    %1944 = vmatprep.subr.bf16.mxu0 %v1887
    %1945 = vmatpush1.bf16.msra.mxu0 %v1886
    %1946 = vmatprep.subr.bf16.mxu0 %v1885
    %1947 = vmatpush1.bf16.msra.mxu0 %v1884
    %1948 = vmatprep.subr.bf16.mxu0 %v1883
    %1949 = vmatpush1.bf16.msra.mxu0 %v1882
    %1950 = vmatprep.subr.bf16.mxu0 %v1881
    %1951 = vmatpush1.bf16.msra.mxu0 %v1880
    %1952 = vmatprep.subr.bf16.mxu0 %v1879
    %1953 = vmatpush1.bf16.msra.mxu0 %v1878
    %1954 = vmatprep.subr.bf16.mxu0 %v1877
    %1955 = vmatpush1.bf16.msra.mxu0 %v1876
    %1956 = vmatprep.subr.bf16.mxu0 %v1907
    %1957 = vmatpush2.bf16.msra.mxu0 %v1906
    %1958 = vmatprep.subr.bf16.mxu0 %v1905
    %1959 = vmatpush2.bf16.msra.mxu0 %v1904
    %1960 = vmatprep.subr.bf16.mxu0 %v1903
    %1961 = vmatpush2.bf16.msra.mxu0 %v1902
    %1962 = vmatprep.subr.bf16.mxu0 %v1901
    %1963 = vmatpush2.bf16.msra.mxu0 %v1900
    %1964 = vmatprep.subr.bf16.mxu0 %v1899
    %1965 = vmatpush2.bf16.msra.mxu0 %v1898
    %1966 = vmatprep.subr.bf16.mxu0 %v1897
    %1967 = vmatpush2.bf16.msra.mxu0 %v1896
    %1968 = vmatprep.subr.bf16.mxu0 %v1895
    %1969 = vmatpush2.bf16.msra.mxu0 %v1894
    %1970 = vmatprep.subr.bf16.mxu0 %v1893
    %1971 = vmatpush2.bf16.msra.mxu0 %v1892
    %1972 = vmatprep.mubr.bf16.mxu0 %v1733
    %1973 = vmatmul.mubr.bf16.gmra.mxu0 %v1732
    %v1974 = vpop.f32.mrf.mxu0
    %v1975 = vadd.f32 %v1773, %v1974
    %v1976 = vpop.f32.mrf.mxu0
    %v1977 = vadd.f32 %v1777, %v1976
    %v1978 = vpop.f32.mrf.mxu0
    %v1979 = vpop.f32.mrf.mxu0
    %1980 = vdwg.mxu0
    %v1981 = vand.u32 2147483647, %v1975
    %vm1982 = vcmp.le.f32.partialorder %v1981, 0.7853982
    %vm1983 = vcmp.lt.s32.totalorder %v1975, 0
    %v1984 = vand.u32 %v1975, 2139095040
    %v1985 = vshrl.u32 %v1984, 23
    %v1986 = vsub.s32 %v1985, 127
    %v1987 = vand.u32 2147483647, %v1975
    %v1988 = vand.u32 %v1987, 8388607
    %v1989 = vor.u32 %v1988, 8388608
    %v1990 = vsub.s32 0, %v1989
    %v1991 = vadd.s32 %v1986, 1
    %vm1992 = vcmp.gt.s32.totalorder %v1991, 0
    %v1993 = vsel %vm1992, %v1991, 0
    %v1994 = vshrl.u32 %v1993, 5
    %v1995 = vand.u32 %v1993, 31
    %v1996 = vsub.s32 32, %v1995
    %v1997 = vshrl.u32 683565275, %v1996
    %v1998 = vshll.u32 683565275, %v1995
    %v1999 = vshrl.u32 2475754826, %v1996
    %v2000 = vor.u32 %v1998, %v1999
    %v2001 = vshll.u32 2475754826, %v1995
    %v2002 = vshrl.u32 2131351028, %v1996
    %v2003 = vor.u32 %v2001, %v2002
    %v2004 = vshll.u32 2131351028, %v1995
    %v2005 = vshrl.u32 2102212464, %v1996
    %v2006 = vor.u32 %v2004, %v2005
    %v2007 = vshll.u32 2102212464, %v1995
    %v2008 = vshrl.u32 920167782, %v1996
    %v2009 = vor.u32 %v2007, %v2008
    %v2010 = vshll.u32 920167782, %v1995
    %v2011 = vshrl.u32 1326507024, %v1996
    %v2012 = vor.u32 %v2010, %v2011
    %vm2013 = vcmp.lt.s32.totalorder %v1994, 1
    %vm2014 = vcmp.lt.s32.totalorder %v1994, 2
    %vm2015 = vcmp.lt.s32.totalorder %v1994, 3
    %vm2016 = vcmp.lt.s32.totalorder %v1994, 4
    %v2017 = vsel %vm2013, %v1997, %v2000
    %v2018 = vsel %vm2016, %v2006, 2102212464
    %v2019 = vsel %vm2015, %v2003, %v2018
    %v2020 = vsel %vm2014, %v2017, %v2019
    %v2021 = vsel %vm2013, %v2000, %v2003
    %v2022 = vsel %vm2016, %v2009, 920167782
    %v2023 = vsel %vm2015, %v2006, %v2022
    %v2024 = vsel %vm2014, %v2021, %v2023
    %v2025 = vsel %vm2013, %v2003, %v2006
    %v2026 = vsel %vm2016, %v2012, 1326507024
    %v2027 = vsel %vm2015, %v2009, %v2026
    %v2028 = vsel %vm2014, %v2025, %v2027
    %v2029 = vshll.u32 %v1989, 8
    %v2030 = vmul.u32.u64.compose %v2029, %v2028
    %v2031 = vextract.low.u32 %v2030
    %v2032 = vextract.high.u32 %v2030
    %v2033 = vmul.u32.u64.compose %v2029, %v2024
    %v2034 = vextract.low.u32 %v2033
    %v2035 = vextract.high.u32 %v2033
    %v2036 = vmul.u32 %v2029, %v2020
    %v2037 = vadd.s32 %v2032, %v2034
    %vm2038 = vc.u32 %v2032, %v2034
    %v2039 = vadd.s32 %v2035, 1
    %v2040 = vsel %vm2038, %v2039, %v2035
    %v2041 = vadd.s32 %v2036, %v2040
    %v2042 = vadd.s32 %v2041, 536870912
    %v2043 = vshrl.u32 %v2042, 30
    %v2044 = vshll.u32 %v2043, 30
    %v2045 = vsub.s32 %v2041, %v2044
    %vm2046 = vcmp.lt.s32.totalorder %v2045, 0
    %v2047 = vsub.s32 0, %v2045
    %v2048 = vsel %vm2046, %v2047, %v2045
    %v2049 = vclz %v2048
    %v2050 = vsub.s32 %v2049, 2
    %vm2051 = vcmp.gt.s32.totalorder 0, %v2050
    %v2052 = vsel %vm2051, 0, %v2050
    %v2053 = vsub.s32 32, %v2052
    %v2054 = vshll.u32 %v2045, %v2052
    %v2055 = vshrl.u32 %v2037, %v2053
    %v2056 = vor.u32 %v2054, %v2055
    %v2057 = vsub.s32 4294967266, %v2052
    %v2058 = vadd.s32 %v2057, 127
    %v2059 = vshll.u32 %v2058, 23
    %v2060 = vor.u32 4788187, %v2059
    %v2061 = vand.u32 2147483647, %v2060
    %v2063 = vcvt.s32.f32 %v2056
    %v2064 = vmul.f32 %v2063, %v2061
    %v2065 = vxor.u32 %v2064, 2147483648
    %v2066 = vsel %vm1983, %v2065, %v2064
    %v2067 = vsub.s32 4, %v2043
    %v2068 = vsel %vm1983, %v2067, %v2043
    %v2069 = vsel %vm1982, %v1975, %v2066
    %v2070 = vsel %vm1982, 0, %v2068
    %v2071 = vcosq.f32.pop %v2069
    %v2072 = vsinq.f32.pop %v2069
    %vm2073 = vweird.f32 %v1975
    %v2074 = vadd.s32 %v2070, 3
    %v2075 = vand.u32 %v2074, 3
    %vm2076 = vcmp.lt.s32.totalorder %v2075, 2
    %vm2077 = vcmp.eq.s32.totalorder %v2075, 0
    %v2078 = vxor.u32 %v2072, 2147483648
    %v2079 = vsel %vm2077, %v2071, %v2078
    %vm2080 = vcmp.eq.s32.totalorder %v2075, 2
    %v2081 = vxor.u32 %v2071, 2147483648
    %v2082 = vsel %vm2080, %v2081, %v2072
    %v2083 = vsel %vm2076, %v2079, %v2082
    %v2084 = vsel %vm2073, nan, %v2083
    %v2085 = vand.u32 2147483647, %v1977
    %vm2086 = vcmp.le.f32.partialorder %v2085, 0.7853982
    %vm2087 = vcmp.lt.s32.totalorder %v1977, 0
    %v2088 = vand.u32 %v1977, 2139095040
    %v2089 = vshrl.u32 %v2088, 23
    %v2090 = vsub.s32 %v2089, 127
    %v2091 = vand.u32 2147483647, %v1977
    %v2092 = vand.u32 %v2091, 8388607
    %v2093 = vor.u32 %v2092, 8388608
    %v2094 = vsub.s32 0, %v2093
    %v2095 = vadd.s32 %v2090, 1
    %vm2096 = vcmp.gt.s32.totalorder %v2095, 0
    %v2097 = vsel %vm2096, %v2095, 0
    %v2098 = vshrl.u32 %v2097, 5
    %v2099 = vand.u32 %v2097, 31
    %v2100 = vsub.s32 32, %v2099
    %v2101 = vshrl.u32 683565275, %v2100
    %v2102 = vshll.u32 683565275, %v2099
    %v2103 = vshrl.u32 2475754826, %v2100
    %v2104 = vor.u32 %v2102, %v2103
    %v2105 = vshll.u32 2475754826, %v2099
    %v2106 = vshrl.u32 2131351028, %v2100
    %v2107 = vor.u32 %v2105, %v2106
    %v2108 = vshll.u32 2131351028, %v2099
    %v2109 = vshrl.u32 2102212464, %v2100
    %v2110 = vor.u32 %v2108, %v2109
    %v2111 = vshll.u32 2102212464, %v2099
    %v2112 = vshrl.u32 920167782, %v2100
    %v2113 = vor.u32 %v2111, %v2112
    %v2114 = vshll.u32 920167782, %v2099
    %v2115 = vshrl.u32 1326507024, %v2100
    %v2116 = vor.u32 %v2114, %v2115
    %vm2117 = vcmp.lt.s32.totalorder %v2098, 1
    %vm2118 = vcmp.lt.s32.totalorder %v2098, 2
    %vm2119 = vcmp.lt.s32.totalorder %v2098, 3
    %vm2120 = vcmp.lt.s32.totalorder %v2098, 4
    %v2121 = vsel %vm2117, %v2101, %v2104
    %v2122 = vsel %vm2120, %v2110, 2102212464
    %v2123 = vsel %vm2119, %v2107, %v2122
    %v2124 = vsel %vm2118, %v2121, %v2123
    %v2125 = vsel %vm2117, %v2104, %v2107
    %v2126 = vsel %vm2120, %v2113, 920167782
    %v2127 = vsel %vm2119, %v2110, %v2126
    %v2128 = vsel %vm2118, %v2125, %v2127
    %v2129 = vsel %vm2117, %v2107, %v2110
    %v2130 = vsel %vm2120, %v2116, 1326507024
    %v2131 = vsel %vm2119, %v2113, %v2130
    %v2132 = vsel %vm2118, %v2129, %v2131
    %v2133 = vshll.u32 %v2093, 8
    %v2134 = vmul.u32.u64.compose %v2133, %v2132
    %v2135 = vextract.low.u32 %v2134
    %v2136 = vextract.high.u32 %v2134
    %v2137 = vmul.u32.u64.compose %v2133, %v2128
    %v2138 = vextract.low.u32 %v2137
    %v2139 = vextract.high.u32 %v2137
    %v2140 = vmul.u32 %v2133, %v2124
    %v2141 = vadd.s32 %v2136, %v2138
    %vm2142 = vc.u32 %v2136, %v2138
    %v2143 = vadd.s32 %v2139, 1
    %v2144 = vsel %vm2142, %v2143, %v2139
    %v2145 = vadd.s32 %v2140, %v2144
    %v2146 = vadd.s32 %v2145, 536870912
    %v2147 = vshrl.u32 %v2146, 30
    %v2148 = vshll.u32 %v2147, 30
    %v2149 = vsub.s32 %v2145, %v2148
    %vm2150 = vcmp.lt.s32.totalorder %v2149, 0
    %v2151 = vsub.s32 0, %v2149
    %v2152 = vsel %vm2150, %v2151, %v2149
    %v2153 = vclz %v2152
    %v2154 = vsub.s32 %v2153, 2
    %vm2155 = vcmp.gt.s32.totalorder 0, %v2154
    %v2156 = vsel %vm2155, 0, %v2154
    %v2157 = vsub.s32 32, %v2156
    %v2158 = vshll.u32 %v2149, %v2156
    %v2159 = vshrl.u32 %v2141, %v2157
    %v2160 = vor.u32 %v2158, %v2159
    %v2161 = vsub.s32 4294967266, %v2156
    %v2162 = vadd.s32 %v2161, 127
    %v2163 = vshll.u32 %v2162, 23
    %v2164 = vor.u32 4788187, %v2163
    %v2165 = vand.u32 2147483647, %v2164
    %v2167 = vcvt.s32.f32 %v2160
    %v2168 = vmul.f32 %v2167, %v2165
    %v2169 = vxor.u32 %v2168, 2147483648
    %v2170 = vsel %vm2087, %v2169, %v2168
    %v2171 = vsub.s32 4, %v2147
    %v2172 = vsel %vm2087, %v2171, %v2147
    %v2173 = vsel %vm2086, %v1977, %v2170
    %v2174 = vsel %vm2086, 0, %v2172
    %v2175 = vcosq.f32.pop %v2173
    %v2176 = vsinq.f32.pop %v2173
    %vm2177 = vweird.f32 %v1977
    %v2178 = vadd.s32 %v2174, 3
    %v2179 = vand.u32 %v2178, 3
    %vm2180 = vcmp.lt.s32.totalorder %v2179, 2
    %vm2181 = vcmp.eq.s32.totalorder %v2179, 0
    %v2182 = vxor.u32 %v2176, 2147483648
    %v2183 = vsel %vm2181, %v2175, %v2182
    %vm2184 = vcmp.eq.s32.totalorder %v2179, 2
    %v2185 = vxor.u32 %v2175, 2147483648
    %v2186 = vsel %vm2184, %v2185, %v2176
    %v2187 = vsel %vm2180, %v2183, %v2186
    %v2188 = vsel %vm2177, nan, %v2187
    %v2189 = vpack.c.bf16 %v2084, %v2084
    %v2190 = vpack.c.bf16 %v2188, %v2188
    %s2191 = scalar_lea.vmem [#allocation4], 1024
    %v2192 = vld [vmem:[%s2191] sm:$0xff]
    %v2193 = vld [vmem:[%s2191 + $0x8] sm:$0xff]
    %v2194 = vld [vmem:[%s2191 + $0x10] sm:$0xff]
    %v2195 = vld [vmem:[%s2191 + $0x18] sm:$0xff]
    %v2196 = vld [vmem:[%s2191 + $0x20] sm:$0xff]
    %v2197 = vld [vmem:[%s2191 + $0x28] sm:$0xff]
    %v2198 = vld [vmem:[%s2191 + $0x30] sm:$0xff]
    %v2199 = vld [vmem:[%s2191 + $0x38] sm:$0xff]
    %v2200 = vld [vmem:[%s2191 + $0x40] sm:$0xff]
    %v2201 = vld [vmem:[%s2191 + $0x48] sm:$0xff]
    %v2202 = vld [vmem:[%s2191 + $0x50] sm:$0xff]
    %v2203 = vld [vmem:[%s2191 + $0x58] sm:$0xff]
    %v2204 = vld [vmem:[%s2191 + $0x60] sm:$0xff]
    %v2205 = vld [vmem:[%s2191 + $0x68] sm:$0xff]
    %v2206 = vld [vmem:[%s2191 + $0x70] sm:$0xff]
    %v2207 = vld [vmem:[%s2191 + $0x78] sm:$0xff]
    %v2208 = vld [vmem:[%s2191 + $0x80] sm:$0xff]
    %v2209 = vld [vmem:[%s2191 + $0x88] sm:$0xff]
    %v2210 = vld [vmem:[%s2191 + $0x90] sm:$0xff]
    %v2211 = vld [vmem:[%s2191 + $0x98] sm:$0xff]
    %v2212 = vld [vmem:[%s2191 + $0xa0] sm:$0xff]
    %v2213 = vld [vmem:[%s2191 + $0xa8] sm:$0xff]
    %v2214 = vld [vmem:[%s2191 + $0xb0] sm:$0xff]
    %v2215 = vld [vmem:[%s2191 + $0xb8] sm:$0xff]
    %v2216 = vld [vmem:[%s2191 + $0xc0] sm:$0xff]
    %v2217 = vld [vmem:[%s2191 + $0xc8] sm:$0xff]
    %v2218 = vld [vmem:[%s2191 + $0xd0] sm:$0xff]
    %v2219 = vld [vmem:[%s2191 + $0xd8] sm:$0xff]
    %v2220 = vld [vmem:[%s2191 + $0xe0] sm:$0xff]
    %v2221 = vld [vmem:[%s2191 + $0xe8] sm:$0xff]
    %v2222 = vld [vmem:[%s2191 + $0xf0] sm:$0xff]
    %v2223 = vld [vmem:[%s2191 + $0xf8] sm:$0xff]
    %s2224 = scalar_lea.vmem %s4, 8
    %v2225 = vld [vmem:[%s2224] sm:$0x3]
    %v2227 = vlaneseq
    %v2228 = vshrl.u32 %v2227, 7
    %v2229 = vsub.s32 0, %v2228
    %v2230 = vrot.slane %v2225, %v2229
    %v2231 = vlaneseq
    %v2232 = vshrl.u32 %v2231, 7
    %v2233 = vsub.s32 1, %v2232
    %v2234 = vrot.slane %v2225, %v2233
    %v2269 = vunpack.c.l.b16 %v2192
    %v2270 = vunpack.c.h.b16 %v2192
    %v2271 = vunpack.c.l.b16 %v2193
    %v2272 = vunpack.c.h.b16 %v2193
    %v2273 = vunpack.c.l.b16 %v2194
    %v2274 = vunpack.c.h.b16 %v2194
    %v2275 = vunpack.c.l.b16 %v2195
    %v2276 = vunpack.c.h.b16 %v2195
    %v2277 = vunpack.c.l.b16 %v2196
    %v2278 = vunpack.c.h.b16 %v2196
    %v2279 = vunpack.c.l.b16 %v2197
    %v2280 = vunpack.c.h.b16 %v2197
    %v2281 = vunpack.c.l.b16 %v2198
    %v2282 = vunpack.c.h.b16 %v2198
    %v2283 = vunpack.c.l.b16 %v2199
    %v2284 = vunpack.c.h.b16 %v2199
    %v2285 = vunpack.c.l.b16 %v2200
    %v2286 = vunpack.c.h.b16 %v2200
    %v2287 = vunpack.c.l.b16 %v2201
    %v2288 = vunpack.c.h.b16 %v2201
    %v2289 = vunpack.c.l.b16 %v2202
    %v2290 = vunpack.c.h.b16 %v2202
    %v2291 = vunpack.c.l.b16 %v2203
    %v2292 = vunpack.c.h.b16 %v2203
    %v2293 = vunpack.c.l.b16 %v2204
    %v2294 = vunpack.c.h.b16 %v2204
    %v2295 = vunpack.c.l.b16 %v2205
    %v2296 = vunpack.c.h.b16 %v2205
    %v2297 = vunpack.c.l.b16 %v2206
    %v2298 = vunpack.c.h.b16 %v2206
    %v2299 = vunpack.c.l.b16 %v2207
    %v2300 = vunpack.c.h.b16 %v2207
    %v2301 = vunpack.c.l.b16 %v2208
    %v2302 = vunpack.c.h.b16 %v2208
    %v2303 = vunpack.c.l.b16 %v2209
    %v2304 = vunpack.c.h.b16 %v2209
    %v2305 = vunpack.c.l.b16 %v2210
    %v2306 = vunpack.c.h.b16 %v2210
    %v2307 = vunpack.c.l.b16 %v2211
    %v2308 = vunpack.c.h.b16 %v2211
    %v2309 = vunpack.c.l.b16 %v2212
    %v2310 = vunpack.c.h.b16 %v2212
    %v2311 = vunpack.c.l.b16 %v2213
    %v2312 = vunpack.c.h.b16 %v2213
    %v2313 = vunpack.c.l.b16 %v2214
    %v2314 = vunpack.c.h.b16 %v2214
    %v2315 = vunpack.c.l.b16 %v2215
    %v2316 = vunpack.c.h.b16 %v2215
    %v2317 = vunpack.c.l.b16 %v2216
    %v2318 = vunpack.c.h.b16 %v2216
    %v2319 = vunpack.c.l.b16 %v2217
    %v2320 = vunpack.c.h.b16 %v2217
    %v2321 = vunpack.c.l.b16 %v2218
    %v2322 = vunpack.c.h.b16 %v2218
    %v2323 = vunpack.c.l.b16 %v2219
    %v2324 = vunpack.c.h.b16 %v2219
    %v2325 = vunpack.c.l.b16 %v2220
    %v2326 = vunpack.c.h.b16 %v2220
    %v2327 = vunpack.c.l.b16 %v2221
    %v2328 = vunpack.c.h.b16 %v2221
    %v2329 = vunpack.c.l.b16 %v2222
    %v2330 = vunpack.c.h.b16 %v2222
    %v2331 = vunpack.c.l.b16 %v2223
    %v2332 = vunpack.c.h.b16 %v2223
    %v2333 = vpack.c.b16 %v2271, %v2269
    %v2334 = vpack.c.b16 %v2272, %v2270
    %v2335 = vpack.c.b16 %v2275, %v2273
    %v2336 = vpack.c.b16 %v2276, %v2274
    %v2337 = vpack.c.b16 %v2279, %v2277
    %v2338 = vpack.c.b16 %v2280, %v2278
    %v2339 = vpack.c.b16 %v2283, %v2281
    %v2340 = vpack.c.b16 %v2284, %v2282
    %v2341 = vpack.c.b16 %v2287, %v2285
    %v2342 = vpack.c.b16 %v2288, %v2286
    %v2343 = vpack.c.b16 %v2291, %v2289
    %v2344 = vpack.c.b16 %v2292, %v2290
    %v2345 = vpack.c.b16 %v2295, %v2293
    %v2346 = vpack.c.b16 %v2296, %v2294
    %v2347 = vpack.c.b16 %v2299, %v2297
    %v2348 = vpack.c.b16 %v2300, %v2298
    %v2349 = vpack.c.b16 %v2303, %v2301
    %v2350 = vpack.c.b16 %v2304, %v2302
    %v2351 = vpack.c.b16 %v2307, %v2305
    %v2352 = vpack.c.b16 %v2308, %v2306
    %v2353 = vpack.c.b16 %v2311, %v2309
    %v2354 = vpack.c.b16 %v2312, %v2310
    %v2355 = vpack.c.b16 %v2315, %v2313
    %v2356 = vpack.c.b16 %v2316, %v2314
    %v2357 = vpack.c.b16 %v2319, %v2317
    %v2358 = vpack.c.b16 %v2320, %v2318
    %v2359 = vpack.c.b16 %v2323, %v2321
    %v2360 = vpack.c.b16 %v2324, %v2322
    %v2361 = vpack.c.b16 %v2327, %v2325
    %v2362 = vpack.c.b16 %v2328, %v2326
    %v2363 = vpack.c.b16 %v2331, %v2329
    %v2364 = vpack.c.b16 %v2332, %v2330
    %2397 = vmatprep.subr.bf16.mxu0 %v2348
    %2398 = vmatpush1.bf16.msra.mxu0 %v2347
    %2399 = vmatprep.subr.bf16.mxu0 %v2346
    %2400 = vmatpush1.bf16.msra.mxu0 %v2345
    %2401 = vmatprep.subr.bf16.mxu0 %v2344
    %2402 = vmatpush1.bf16.msra.mxu0 %v2343
    %2403 = vmatprep.subr.bf16.mxu0 %v2342
    %2404 = vmatpush1.bf16.msra.mxu0 %v2341
    %2405 = vmatprep.subr.bf16.mxu0 %v2340
    %2406 = vmatpush1.bf16.msra.mxu0 %v2339
    %2407 = vmatprep.subr.bf16.mxu0 %v2338
    %2408 = vmatpush1.bf16.msra.mxu0 %v2337
    %2409 = vmatprep.subr.bf16.mxu0 %v2336
    %2410 = vmatpush1.bf16.msra.mxu0 %v2335
    %2411 = vmatprep.subr.bf16.mxu0 %v2334
    %2412 = vmatpush1.bf16.msra.mxu0 %v2333
    %2413 = vmatprep.subr.bf16.mxu0 %v2364
    %2414 = vmatpush2.bf16.msra.mxu0 %v2363
    %2415 = vmatprep.subr.bf16.mxu0 %v2362
    %2416 = vmatpush2.bf16.msra.mxu0 %v2361
    %2417 = vmatprep.subr.bf16.mxu0 %v2360
    %2418 = vmatpush2.bf16.msra.mxu0 %v2359
    %2419 = vmatprep.subr.bf16.mxu0 %v2358
    %2420 = vmatpush2.bf16.msra.mxu0 %v2357
    %2421 = vmatprep.subr.bf16.mxu0 %v2356
    %2422 = vmatpush2.bf16.msra.mxu0 %v2355
    %2423 = vmatprep.subr.bf16.mxu0 %v2354
    %2424 = vmatpush2.bf16.msra.mxu0 %v2353
    %2425 = vmatprep.subr.bf16.mxu0 %v2352
    %2426 = vmatpush2.bf16.msra.mxu0 %v2351
    %2427 = vmatprep.subr.bf16.mxu0 %v2350
    %2428 = vmatpush2.bf16.msra.mxu0 %v2349
    %2429 = vmatprep.mubr.bf16.mxu0 %v2190
    %2430 = vmatmul.mubr.bf16.gmra.mxu0 %v2189
    %v2431 = vpop.f32.mrf.mxu0
    %v2432 = vadd.f32 %v2230, %v2431
    %v2433 = vpop.f32.mrf.mxu0
    %v2434 = vadd.f32 %v2234, %v2433
    %v2435 = vpop.f32.mrf.mxu0
    %v2436 = vpop.f32.mrf.mxu0
    %2437 = vdwg.mxu0
    %2438 = vst [vmem:[%s5] sm:$0xff] %v2432
    %2439 = vst [vmem:[%s5 + $0x8] sm:$0xff] %v2434
    // Predicated region
    $region30: #{mp_forward.1} parent=1 // pred_check
      _
    $region31: #{mp_forward.1} parent=1 // pred_check_branch
      %2441 = sbr.rel (0) target = $region33
    $region32: #{mp_forward.1} parent=1 // pred_region
      _
    $region33: #{mp_forward.1} parent=1 // pred_fallthru
      _
    // Predicated region
    $region34: #{mp_forward.1} parent=1 // pred_check
      _
    $region35: #{mp_forward.1} parent=1 // pred_check_branch
      %2443 = sbr.rel (0) target = $region37
    $region36: #{mp_forward.1} parent=1 // pred_region
      _
    $region37: #{mp_forward.1} parent=1 // pred_fallthru
      _
    %2444 = vsyncpa [#allocation3], 1
    %2445 = vsyncpa [#allocation5], 1

</llo_original>
